<compile_context>
chip_gen: v7x
topology: tpu7x:2x2x1
jax: 0.10.0
libtpu: 0.0.40
codegen_flags: <defaults>
</compile_context>

<pallas_src>
import numpy as np
import jax
import jax.numpy as jnp
from jax.experimental import pallas as pl
from jax.experimental.pallas import tpu as pltpu

# ---- synthetic hyperparameters (small, consistent with the module) ----
B = 8            # batch
C = 16           # in_channels (even, split in half by the coupling)
H = 32           # hidden_dim (per s/t net; fused hidden = 2H)
DEPTH = 2        # hidden_depth
N_FLOWS = 2      # n_flows
CH = C // 2

LRELU_SLOPE = 0.01       # nn.LeakyReLU() default inside BasicFullyConnectedNet
INV_LRELU_ALPHA = 0.9    # InvLeakyRelu alpha ('lrelu' activation of the block)


# ----------------------------- Pallas kernel -----------------------------
def _fused_mlp(h, f, i, w_in_ref, b_in_ref, w_mid_ref, b_mid_ref, w_out_ref, b_out_ref):
    """Fused s/t BasicFullyConnectedNet: one pass, hidden width 2H, output 2*CH.

    Weights are packed on the host: first layer (CH, 2H) = [Ws_in | Wt_in],
    mid layers block-diag(Ws_mid, Wt_mid), output block-diag(Ws_out, Wt_out),
    so the s and t paths never mix (LeakyReLU is elementwise)."""
    z = jnp.dot(h, w_in_ref[f, i], preferred_element_type=jnp.float32) + b_in_ref[f, i]
    z = jnp.where(z >= 0, z, LRELU_SLOPE * z)
    for d in range(DEPTH):
        z = jnp.dot(z, w_mid_ref[f, i, d], preferred_element_type=jnp.float32) + b_mid_ref[f, i, d]
        z = jnp.where(z >= 0, z, LRELU_SLOPE * z)
    z = jnp.dot(z, w_out_ref[f, i], preferred_element_type=jnp.float32) + b_out_ref[f, i]
    return z                                          # (B, 2*CH): [:CH]=s_pre, [CH:]=t


def flow_kernel(x_ref, loc_a_ref, loc_b_ref, scale_a_ref, scale_b_ref,
                w_in_ref, b_in_ref, w_mid_ref, b_mid_ref, w_out_ref, b_out_ref,
                paa_ref, pab_ref, pba_ref, pbb_ref, an_ld_ref,
                y_ref, ld_ref):
    x = x_ref[...]                                    # (B, C) float32
    xa = x[:, :CH]                                    # halves kept split for the whole kernel
    xb = x[:, CH:]
    logdet = jnp.zeros((B, 1), jnp.float32)

    for f in range(N_FLOWS):                          # sequential flow stack, unrolled
        # --- ActNorm (post-init affine), params pre-split into halves on the host.
        #     Its logdet term is data independent -> precomputed on host (an_ld_ref).
        xa = scale_a_ref[f] * (xa + loc_a_ref[f])
        xb = scale_b_ref[f] * (xb + loc_b_ref[f])

        # --- InvLeakyRelu (alpha=0.9); reference implementation contributes 0 logdet
        xa = jnp.where(xa >= 0, xa, INV_LRELU_ALPHA * xa)
        xb = jnp.where(xb >= 0, xb, INV_LRELU_ALPHA * xb)

        # --- DoubleVectorCouplingBlock: two affine couplings, fused s/t MLP each
        for i in range(2):
            if i == 1:                                # swap halves before the 2nd coupling
                xa, xb = xb, xa
            z = _fused_mlp(xa, f, i,
                           w_in_ref, b_in_ref, w_mid_ref, b_mid_ref, w_out_ref, b_out_ref)
            s = jnp.tanh(z[:, :CH])                   # tanh head only on the s half
            t = z[:, CH:]
            xb = xb * jnp.exp(s) + t
            logdet = logdet + jnp.sum(s, axis=-1, keepdims=True)

        # --- Shuffle: fixed channel permutation as 4 sub-block matmuls
        #     (xa, xb) -> (xa', xb'); avoids concat/slice around the permute.
        xa_n = (jnp.dot(xa, paa_ref[f], preferred_element_type=jnp.float32) +
                jnp.dot(xb, pba_ref[f], preferred_element_type=jnp.float32))
        xb_n = (jnp.dot(xa, pab_ref[f], preferred_element_type=jnp.float32) +
                jnp.dot(xb, pbb_ref[f], preferred_element_type=jnp.float32))
        xa, xb = xa_n, xb_n

    logdet = logdet + an_ld_ref[...]                  # host-precomputed ActNorm logdet (scalar)

    y_ref[...] = jnp.concatenate([xa, xb], axis=1)    # single full-block store
    ld_ref[...] = logdet


def unconditional_flow_forward(x, packed):
    """Returns (x_out (B,C), logdet (B,)) like UnconditionalFlow.forward(x, reverse=False)."""
    arrays = [x] + list(packed)
    vmem = pl.BlockSpec(memory_space=pltpu.MemorySpace.VMEM)

    y, ld = pl.pallas_call(
        flow_kernel,
        in_specs=[vmem] * len(arrays),
        out_specs=(vmem, vmem),
        out_shape=(jax.ShapeDtypeStruct((B, C), jnp.float32),
                   jax.ShapeDtypeStruct((B, 1), jnp.float32)),
    )(*arrays)
    return y, ld[:, 0]


# ------------------------- deterministic parameter init -------------------------
def init_params(key):
    """Original (unfused) parameterization, matching the PyTorch module layout."""
    ks = jax.random.split(key, 8)
    loc = 0.10 * jax.random.normal(ks[0], (N_FLOWS, 1, C), jnp.float32)
    scale = 1.0 + 0.10 * jax.random.normal(ks[1], (N_FLOWS, 1, C), jnp.float32)
    # 4 MLPs per flow: [s0, s1, t0, t1]; weights stored as (in, out) so kernel does x @ W + b
    w_in = 0.20 * jax.random.normal(ks[2], (N_FLOWS, 4, CH, H), jnp.float32)
    b_in = 0.05 * jax.random.normal(ks[3], (N_FLOWS, 4, 1, H), jnp.float32)
    w_mid = 0.20 * jax.random.normal(ks[4], (N_FLOWS, 4, DEPTH, H, H), jnp.float32)
    b_mid = 0.05 * jax.random.normal(ks[5], (N_FLOWS, 4, DEPTH, 1, H), jnp.float32)
    w_out = 0.20 * jax.random.normal(ks[6], (N_FLOWS, 4, H, CH), jnp.float32)
    b_out = 0.05 * jax.random.normal(ks[7], (N_FLOWS, 4, 1, CH), jnp.float32)
    # Shuffle permutation (torch.randperm buffer) -> one-hot matrix: (h @ P)[:, j] = h[:, perm[j]]
    perm_idx = np.stack([np.random.RandomState(f).permutation(C) for f in range(N_FLOWS)])
    perm = np.zeros((N_FLOWS, C, C), np.float32)
    for f in range(N_FLOWS):
        for j in range(C):
            perm[f, perm_idx[f, j], j] = 1.0
    return (loc, scale, w_in, b_in, w_mid, b_mid, w_out, b_out, jnp.asarray(perm))


def pack_params(params):
    """Host-side packing for the kernel: split ActNorm params per half, fuse the s/t
    MLPs of each coupling into one wider (block-diagonal) MLP, split the shuffle
    permutation into its 4 CH x CH sub-blocks, and precompute the ActNorm logdet."""
    loc, scale, w_in, b_in, w_mid, b_mid, w_out, b_out, perm = params

    loc_a, loc_b = loc[:, :, :CH], loc[:, :, CH:]
    scale_a, scale_b = scale[:, :, :CH], scale[:, :, CH:]

    # net index convention in params: s-nets at [0,1], t-nets at [2,3]
    # first layer: (CH, 2H) = [Ws_in | Wt_in]
    w_in_f = jnp.concatenate([w_in[:, :2], w_in[:, 2:]], axis=-1)      # (F, 2, CH, 2H)
    b_in_f = jnp.concatenate([b_in[:, :2], b_in[:, 2:]], axis=-1)      # (F, 2, 1, 2H)
    # mid layers: block-diag(Ws_mid, Wt_mid) -> (2H, 2H)
    zmid = jnp.zeros((N_FLOWS, 2, DEPTH, H, H), jnp.float32)
    w_mid_f = jnp.concatenate(
        [jnp.concatenate([w_mid[:, :2], zmid], axis=-1),
         jnp.concatenate([zmid, w_mid[:, 2:]], axis=-1)], axis=-2)     # (F, 2, D, 2H, 2H)
    b_mid_f = jnp.concatenate([b_mid[:, :2], b_mid[:, 2:]], axis=-1)   # (F, 2, D, 1, 2H)
    # output layer: block-diag(Ws_out, Wt_out) -> (2H, 2CH); [:CH]=s_pre, [CH:]=t
    zout = jnp.zeros((N_FLOWS, 2, H, CH), jnp.float32)
    w_out_f = jnp.concatenate(
        [jnp.concatenate([w_out[:, :2], zout], axis=-1),
         jnp.concatenate([zout, w_out[:, 2:]], axis=-1)], axis=-2)     # (F, 2, 2H, 2CH)
    b_out_f = jnp.concatenate([b_out[:, :2], b_out[:, 2:]], axis=-1)   # (F, 2, 1, 2CH)

    # permutation sub-blocks
    paa = perm[:, :CH, :CH]
    pab = perm[:, :CH, CH:]
    pba = perm[:, CH:, :CH]
    pbb = perm[:, CH:, CH:]

    # data-independent ActNorm logdet (summed over all flows), per sample
    an_ld = jnp.sum(jnp.log(jnp.abs(scale))).reshape(1, 1).astype(jnp.float32)

    return (loc_a, loc_b, scale_a, scale_b, w_in_f, b_in_f, w_mid_f, b_mid_f,
            w_out_f, b_out_f, paa, pab, pba, pbb, an_ld)


# ------------------------- plain-JAX reference (for validation) -------------------------
def reference_forward(x, params):
    loc, scale, w_in, b_in, w_mid, b_mid, w_out, b_out, perm = params

    def mlp(a, f, n):
        z = a @ w_in[f, n] + b_in[f, n]
        z = jnp.where(z >= 0, z, LRELU_SLOPE * z)
        for d in range(DEPTH):
            z = z @ w_mid[f, n, d] + b_mid[f, n, d]
            z = jnp.where(z >= 0, z, LRELU_SLOPE * z)
        return z @ w_out[f, n] + b_out[f, n]

    h = x
    logdet = jnp.zeros((x.shape[0],), jnp.float32)
    for f in range(N_FLOWS):
        h = scale[f] * (h + loc[f])
        logdet = logdet + jnp.sum(jnp.log(jnp.abs(scale[f])))
        h = jnp.where(h >= 0, h, INV_LRELU_ALPHA * h)
        for i in range(2):
            if i % 2 != 0:
                h = jnp.concatenate([h[:, CH:], h[:, :CH]], axis=1)
            xa, xb = h[:, :CH], h[:, CH:]
            s = jnp.tanh(mlp(xa, f, i))
            t = mlp(xa, f, 2 + i)
            h = jnp.concatenate([xa, xb * jnp.exp(s) + t], axis=1)
            logdet = logdet + jnp.sum(s, axis=1)
        h = h @ perm[f]
    return h, logdet


if __name__ == "__main__":
    key = jax.random.PRNGKey(0)
    kx, kp = jax.random.split(key)
    x = jax.random.normal(kx, (B, C), jnp.float32)
    params = init_params(kp)
    packed = pack_params(params)

    y, logdet = unconditional_flow_forward(x, packed)
    y = jax.block_until_ready(y)
    logdet = jax.block_until_ready(logdet)

    y_ref, ld_ref = reference_forward(x, params)
    np.testing.assert_allclose(np.asarray(y), np.asarray(y_ref), rtol=1e-4, atol=1e-4)
    np.testing.assert_allclose(np.asarray(logdet), np.asarray(ld_ref), rtol=1e-4, atol=1e-4)

    # TODO(synk): reverse=True path (inverse flow / sample()) and the Python-side
    # bookkeeping lists (self.last_outs / self.last_logdets) are not materialized here.
    print("KERNEL_OK")
</pallas_src>

<mosaic_0001>
module attributes {stable_mosaic.version = 11 : i64} {
  func.func @flow_kernel(%arg0: memref<8x16xf32, #tpu.memory_space<vmem>>, %arg1: memref<2x1x8xf32, #tpu.memory_space<vmem>>, %arg2: memref<2x1x8xf32, #tpu.memory_space<vmem>>, %arg3: memref<2x1x8xf32, #tpu.memory_space<vmem>>, %arg4: memref<2x1x8xf32, #tpu.memory_space<vmem>>, %arg5: memref<2x2x8x64xf32, #tpu.memory_space<vmem>>, %arg6: memref<2x2x1x64xf32, #tpu.memory_space<vmem>>, %arg7: memref<2x2x2x64x64xf32, #tpu.memory_space<vmem>>, %arg8: memref<2x2x2x1x64xf32, #tpu.memory_space<vmem>>, %arg9: memref<2x2x64x16xf32, #tpu.memory_space<vmem>>, %arg10: memref<2x2x1x16xf32, #tpu.memory_space<vmem>>, %arg11: memref<2x8x8xf32, #tpu.memory_space<vmem>>, %arg12: memref<2x8x8xf32, #tpu.memory_space<vmem>>, %arg13: memref<2x8x8xf32, #tpu.memory_space<vmem>>, %arg14: memref<2x8x8xf32, #tpu.memory_space<vmem>>, %arg15: memref<1x1xf32, #tpu.memory_space<vmem>>, %arg16: memref<8x16xf32, #tpu.memory_space<vmem>>, %arg17: memref<8x1xf32, #tpu.memory_space<vmem>>) attributes {dimension_semantics = [], scalar_prefetch = 0 : i64, scratch_operands = 0 : i64, tpu.core_type = #tpu.core_type<tc>} {
    %c0 = arith.constant 0 : index
    %c0_0 = arith.constant 0 : index
    %0 = vector.load %arg0[%c0, %c0_0] : memref<8x16xf32, #tpu.memory_space<vmem>>, vector<8x16xf32>
    %1 = vector.extract_strided_slice %0 {offsets = [0, 0], sizes = [8, 8], strides = [1, 1]} : vector<8x16xf32> to vector<8x8xf32>
    %2 = vector.extract_strided_slice %0 {offsets = [0, 8], sizes = [8, 8], strides = [1, 1]} : vector<8x16xf32> to vector<8x8xf32>
    %cst = arith.constant 0.000000e+00 : f32
    %3 = vector.broadcast %cst : f32 to vector<8x1xf32>
    %c0_1 = arith.constant 0 : index
    %c0_2 = arith.constant 0 : index
    %c0_3 = arith.constant 0 : index
    %4 = vector.load %arg3[%c0_1, %c0_2, %c0_3] : memref<2x1x8xf32, #tpu.memory_space<vmem>>, vector<1x1x8xf32>
    %5 = vector.shape_cast %4 : vector<1x1x8xf32> to vector<1x8xf32>
    %c0_4 = arith.constant 0 : index
    %c0_5 = arith.constant 0 : index
    %c0_6 = arith.constant 0 : index
    %6 = vector.load %arg1[%c0_4, %c0_5, %c0_6] : memref<2x1x8xf32, #tpu.memory_space<vmem>>, vector<1x1x8xf32>
    %7 = vector.shape_cast %6 : vector<1x1x8xf32> to vector<1x8xf32>
    %8 = vector.broadcast %7 : vector<1x8xf32> to vector<8x8xf32>
    %9 = arith.addf %1, %8 : vector<8x8xf32>
    %10 = vector.broadcast %5 : vector<1x8xf32> to vector<8x8xf32>
    %11 = arith.mulf %10, %9 : vector<8x8xf32>
    %c0_7 = arith.constant 0 : index
    %c0_8 = arith.constant 0 : index
    %c0_9 = arith.constant 0 : index
    %12 = vector.load %arg4[%c0_7, %c0_8, %c0_9] : memref<2x1x8xf32, #tpu.memory_space<vmem>>, vector<1x1x8xf32>
    %13 = vector.shape_cast %12 : vector<1x1x8xf32> to vector<1x8xf32>
    %c0_10 = arith.constant 0 : index
    %c0_11 = arith.constant 0 : index
    %c0_12 = arith.constant 0 : index
    %14 = vector.load %arg2[%c0_10, %c0_11, %c0_12] : memref<2x1x8xf32, #tpu.memory_space<vmem>>, vector<1x1x8xf32>
    %15 = vector.shape_cast %14 : vector<1x1x8xf32> to vector<1x8xf32>
    %16 = vector.broadcast %15 : vector<1x8xf32> to vector<8x8xf32>
    %17 = arith.addf %2, %16 : vector<8x8xf32>
    %18 = vector.broadcast %13 : vector<1x8xf32> to vector<8x8xf32>
    %19 = arith.mulf %18, %17 : vector<8x8xf32>
    %cst_13 = arith.constant 0.000000e+00 : f32
    %20 = vector.broadcast %cst_13 : f32 to vector<8x8xf32>
    %21 = arith.cmpf oge, %11, %20 : vector<8x8xf32>
    %cst_14 = arith.constant 0.899999976 : f32
    %22 = vector.broadcast %cst_14 : f32 to vector<8x8xf32>
    %23 = arith.mulf %22, %11 : vector<8x8xf32>
    %24 = arith.select %21, %11, %23 : vector<8x8xi1>, vector<8x8xf32>
    %cst_15 = arith.constant 0.000000e+00 : f32
    %25 = vector.broadcast %cst_15 : f32 to vector<8x8xf32>
    %26 = arith.cmpf oge, %19, %25 : vector<8x8xf32>
    %cst_16 = arith.constant 0.899999976 : f32
    %27 = vector.broadcast %cst_16 : f32 to vector<8x8xf32>
    %28 = arith.mulf %27, %19 : vector<8x8xf32>
    %29 = arith.select %26, %19, %28 : vector<8x8xi1>, vector<8x8xf32>
    %c0_17 = arith.constant 0 : index
    %c0_18 = arith.constant 0 : index
    %c0_19 = arith.constant 0 : index
    %c0_20 = arith.constant 0 : index
    %30 = vector.load %arg5[%c0_17, %c0_18, %c0_19, %c0_20] : memref<2x2x8x64xf32, #tpu.memory_space<vmem>>, vector<1x1x8x64xf32>
    %31 = vector.shape_cast %30 : vector<1x1x8x64xf32> to vector<8x64xf32>
    %cst_21 = arith.constant dense<0.000000e+00> : vector<8x64xf32>
    %32 = tpu.matmul %24, %31, %cst_21 {dimension_numbers = #tpu.dot_dimension_numbers<[1], [0], [0], [1], [0, 0, 1, 1], [], []>} : vector<8x8xf32>, vector<8x64xf32>, vector<8x64xf32> -> vector<8x64xf32>
    %c0_22 = arith.constant 0 : index
    %c0_23 = arith.constant 0 : index
    %c0_24 = arith.constant 0 : index
    %c0_25 = arith.constant 0 : index
    %33 = vector.load %arg6[%c0_22, %c0_23, %c0_24, %c0_25] : memref<2x2x1x64xf32, #tpu.memory_space<vmem>>, vector<1x1x1x64xf32>
    %34 = vector.shape_cast %33 : vector<1x1x1x64xf32> to vector<1x64xf32>
    %35 = vector.broadcast %34 : vector<1x64xf32> to vector<8x64xf32>
    %36 = arith.addf %32, %35 : vector<8x64xf32>
    %cst_26 = arith.constant 0.000000e+00 : f32
    %37 = vector.broadcast %cst_26 : f32 to vector<8x64xf32>
    %38 = arith.cmpf oge, %36, %37 : vector<8x64xf32>
    %cst_27 = arith.constant 0.00999999977 : f32
    %39 = vector.broadcast %cst_27 : f32 to vector<8x64xf32>
    %40 = arith.mulf %39, %36 : vector<8x64xf32>
    %41 = arith.select %38, %36, %40 : vector<8x64xi1>, vector<8x64xf32>
    %c0_28 = arith.constant 0 : index
    %c0_29 = arith.constant 0 : index
    %c0_30 = arith.constant 0 : index
    %c0_31 = arith.constant 0 : index
    %c0_32 = arith.constant 0 : index
    %42 = vector.load %arg7[%c0_28, %c0_29, %c0_30, %c0_31, %c0_32] : memref<2x2x2x64x64xf32, #tpu.memory_space<vmem>>, vector<1x1x1x64x64xf32>
    %43 = vector.shape_cast %42 : vector<1x1x1x64x64xf32> to vector<64x64xf32>
    %cst_33 = arith.constant dense<0.000000e+00> : vector<8x64xf32>
    %44 = tpu.matmul %41, %43, %cst_33 {dimension_numbers = #tpu.dot_dimension_numbers<[1], [0], [0], [1], [0, 0, 1, 1], [], []>} : vector<8x64xf32>, vector<64x64xf32>, vector<8x64xf32> -> vector<8x64xf32>
    %c0_34 = arith.constant 0 : index
    %c0_35 = arith.constant 0 : index
    %c0_36 = arith.constant 0 : index
    %c0_37 = arith.constant 0 : index
    %c0_38 = arith.constant 0 : index
    %45 = vector.load %arg8[%c0_34, %c0_35, %c0_36, %c0_37, %c0_38] : memref<2x2x2x1x64xf32, #tpu.memory_space<vmem>>, vector<1x1x1x1x64xf32>
    %46 = vector.shape_cast %45 : vector<1x1x1x1x64xf32> to vector<1x64xf32>
    %47 = vector.broadcast %46 : vector<1x64xf32> to vector<8x64xf32>
    %48 = arith.addf %44, %47 : vector<8x64xf32>
    %cst_39 = arith.constant 0.000000e+00 : f32
    %49 = vector.broadcast %cst_39 : f32 to vector<8x64xf32>
    %50 = arith.cmpf oge, %48, %49 : vector<8x64xf32>
    %cst_40 = arith.constant 0.00999999977 : f32
    %51 = vector.broadcast %cst_40 : f32 to vector<8x64xf32>
    %52 = arith.mulf %51, %48 : vector<8x64xf32>
    %53 = arith.select %50, %48, %52 : vector<8x64xi1>, vector<8x64xf32>
    %c0_41 = arith.constant 0 : index
    %c0_42 = arith.constant 0 : index
    %c1 = arith.constant 1 : index
    %c0_43 = arith.constant 0 : index
    %c0_44 = arith.constant 0 : index
    %54 = vector.load %arg7[%c0_41, %c0_42, %c1, %c0_43, %c0_44] : memref<2x2x2x64x64xf32, #tpu.memory_space<vmem>>, vector<1x1x1x64x64xf32>
    %55 = vector.shape_cast %54 : vector<1x1x1x64x64xf32> to vector<64x64xf32>
    %cst_45 = arith.constant dense<0.000000e+00> : vector<8x64xf32>
    %56 = tpu.matmul %53, %55, %cst_45 {dimension_numbers = #tpu.dot_dimension_numbers<[1], [0], [0], [1], [0, 0, 1, 1], [], []>} : vector<8x64xf32>, vector<64x64xf32>, vector<8x64xf32> -> vector<8x64xf32>
    %c0_46 = arith.constant 0 : index
    %c0_47 = arith.constant 0 : index
    %c1_48 = arith.constant 1 : index
    %c0_49 = arith.constant 0 : index
    %c0_50 = arith.constant 0 : index
    %57 = vector.load %arg8[%c0_46, %c0_47, %c1_48, %c0_49, %c0_50] : memref<2x2x2x1x64xf32, #tpu.memory_space<vmem>>, vector<1x1x1x1x64xf32>
    %58 = vector.shape_cast %57 : vector<1x1x1x1x64xf32> to vector<1x64xf32>
    %59 = vector.broadcast %58 : vector<1x64xf32> to vector<8x64xf32>
    %60 = arith.addf %56, %59 : vector<8x64xf32>
    %cst_51 = arith.constant 0.000000e+00 : f32
    %61 = vector.broadcast %cst_51 : f32 to vector<8x64xf32>
    %62 = arith.cmpf oge, %60, %61 : vector<8x64xf32>
    %cst_52 = arith.constant 0.00999999977 : f32
    %63 = vector.broadcast %cst_52 : f32 to vector<8x64xf32>
    %64 = arith.mulf %63, %60 : vector<8x64xf32>
    %65 = arith.select %62, %60, %64 : vector<8x64xi1>, vector<8x64xf32>
    %c0_53 = arith.constant 0 : index
    %c0_54 = arith.constant 0 : index
    %c0_55 = arith.constant 0 : index
    %c0_56 = arith.constant 0 : index
    %66 = vector.load %arg9[%c0_53, %c0_54, %c0_55, %c0_56] : memref<2x2x64x16xf32, #tpu.memory_space<vmem>>, vector<1x1x64x16xf32>
    %67 = vector.shape_cast %66 : vector<1x1x64x16xf32> to vector<64x16xf32>
    %cst_57 = arith.constant dense<0.000000e+00> : vector<8x16xf32>
    %68 = tpu.matmul %65, %67, %cst_57 {dimension_numbers = #tpu.dot_dimension_numbers<[1], [0], [0], [1], [0, 0, 1, 1], [], []>} : vector<8x64xf32>, vector<64x16xf32>, vector<8x16xf32> -> vector<8x16xf32>
    %c0_58 = arith.constant 0 : index
    %c0_59 = arith.constant 0 : index
    %c0_60 = arith.constant 0 : index
    %c0_61 = arith.constant 0 : index
    %69 = vector.load %arg10[%c0_58, %c0_59, %c0_60, %c0_61] : memref<2x2x1x16xf32, #tpu.memory_space<vmem>>, vector<1x1x1x16xf32>
    %70 = vector.shape_cast %69 : vector<1x1x1x16xf32> to vector<1x16xf32>
    %71 = vector.broadcast %70 : vector<1x16xf32> to vector<8x16xf32>
    %72 = arith.addf %68, %71 : vector<8x16xf32>
    %73 = vector.extract_strided_slice %72 {offsets = [0, 0], sizes = [8, 8], strides = [1, 1]} : vector<8x16xf32> to vector<8x8xf32>
    %74 = math.tanh %73 : vector<8x8xf32>
    %75 = vector.extract_strided_slice %72 {offsets = [0, 8], sizes = [8, 8], strides = [1, 1]} : vector<8x16xf32> to vector<8x8xf32>
    %76 = math.exp %74 : vector<8x8xf32>
    %77 = arith.mulf %29, %76 : vector<8x8xf32>
    %78 = arith.addf %77, %75 : vector<8x8xf32>
    %cst_62 = arith.constant dense<0.000000e+00> : vector<8xf32>
    %79 = vector.multi_reduction <add>, %74, %cst_62 [1] : vector<8x8xf32> to vector<8xf32>
    %80 = vector.shape_cast %79 : vector<8xf32> to vector<8x1xf32>
    %81 = arith.addf %3, %80 : vector<8x1xf32>
    %c0_63 = arith.constant 0 : index
    %c1_64 = arith.constant 1 : index
    %c0_65 = arith.constant 0 : index
    %c0_66 = arith.constant 0 : index
    %82 = vector.load %arg5[%c0_63, %c1_64, %c0_65, %c0_66] : memref<2x2x8x64xf32, #tpu.memory_space<vmem>>, vector<1x1x8x64xf32>
    %83 = vector.shape_cast %82 : vector<1x1x8x64xf32> to vector<8x64xf32>
    %cst_67 = arith.constant dense<0.000000e+00> : vector<8x64xf32>
    %84 = tpu.matmul %78, %83, %cst_67 {dimension_numbers = #tpu.dot_dimension_numbers<[1], [0], [0], [1], [0, 0, 1, 1], [], []>} : vector<8x8xf32>, vector<8x64xf32>, vector<8x64xf32> -> vector<8x64xf32>
    %c0_68 = arith.constant 0 : index
    %c1_69 = arith.constant 1 : index
    %c0_70 = arith.constant 0 : index
    %c0_71 = arith.constant 0 : index
    %85 = vector.load %arg6[%c0_68, %c1_69, %c0_70, %c0_71] : memref<2x2x1x64xf32, #tpu.memory_space<vmem>>, vector<1x1x1x64xf32>
    %86 = vector.shape_cast %85 : vector<1x1x1x64xf32> to vector<1x64xf32>
    %87 = vector.broadcast %86 : vector<1x64xf32> to vector<8x64xf32>
    %88 = arith.addf %84, %87 : vector<8x64xf32>
    %cst_72 = arith.constant 0.000000e+00 : f32
    %89 = vector.broadcast %cst_72 : f32 to vector<8x64xf32>
    %90 = arith.cmpf oge, %88, %89 : vector<8x64xf32>
    %cst_73 = arith.constant 0.00999999977 : f32
    %91 = vector.broadcast %cst_73 : f32 to vector<8x64xf32>
    %92 = arith.mulf %91, %88 : vector<8x64xf32>
    %93 = arith.select %90, %88, %92 : vector<8x64xi1>, vector<8x64xf32>
    %c0_74 = arith.constant 0 : index
    %c1_75 = arith.constant 1 : index
    %c0_76 = arith.constant 0 : index
    %c0_77 = arith.constant 0 : index
    %c0_78 = arith.constant 0 : index
    %94 = vector.load %arg7[%c0_74, %c1_75, %c0_76, %c0_77, %c0_78] : memref<2x2x2x64x64xf32, #tpu.memory_space<vmem>>, vector<1x1x1x64x64xf32>
    %95 = vector.shape_cast %94 : vector<1x1x1x64x64xf32> to vector<64x64xf32>
    %cst_79 = arith.constant dense<0.000000e+00> : vector<8x64xf32>
    %96 = tpu.matmul %93, %95, %cst_79 {dimension_numbers = #tpu.dot_dimension_numbers<[1], [0], [0], [1], [0, 0, 1, 1], [], []>} : vector<8x64xf32>, vector<64x64xf32>, vector<8x64xf32> -> vector<8x64xf32>
    %c0_80 = arith.constant 0 : index
    %c1_81 = arith.constant 1 : index
    %c0_82 = arith.constant 0 : index
    %c0_83 = arith.constant 0 : index
    %c0_84 = arith.constant 0 : index
    %97 = vector.load %arg8[%c0_80, %c1_81, %c0_82, %c0_83, %c0_84] : memref<2x2x2x1x64xf32, #tpu.memory_space<vmem>>, vector<1x1x1x1x64xf32>
    %98 = vector.shape_cast %97 : vector<1x1x1x1x64xf32> to vector<1x64xf32>
    %99 = vector.broadcast %98 : vector<1x64xf32> to vector<8x64xf32>
    %100 = arith.addf %96, %99 : vector<8x64xf32>
    %cst_85 = arith.constant 0.000000e+00 : f32
    %101 = vector.broadcast %cst_85 : f32 to vector<8x64xf32>
    %102 = arith.cmpf oge, %100, %101 : vector<8x64xf32>
    %cst_86 = arith.constant 0.00999999977 : f32
    %103 = vector.broadcast %cst_86 : f32 to vector<8x64xf32>
    %104 = arith.mulf %103, %100 : vector<8x64xf32>
    %105 = arith.select %102, %100, %104 : vector<8x64xi1>, vector<8x64xf32>
    %c0_87 = arith.constant 0 : index
    %c1_88 = arith.constant 1 : index
    %c1_89 = arith.constant 1 : index
    %c0_90 = arith.constant 0 : index
    %c0_91 = arith.constant 0 : index
    %106 = vector.load %arg7[%c0_87, %c1_88, %c1_89, %c0_90, %c0_91] : memref<2x2x2x64x64xf32, #tpu.memory_space<vmem>>, vector<1x1x1x64x64xf32>
    %107 = vector.shape_cast %106 : vector<1x1x1x64x64xf32> to vector<64x64xf32>
    %cst_92 = arith.constant dense<0.000000e+00> : vector<8x64xf32>
    %108 = tpu.matmul %105, %107, %cst_92 {dimension_numbers = #tpu.dot_dimension_numbers<[1], [0], [0], [1], [0, 0, 1, 1], [], []>} : vector<8x64xf32>, vector<64x64xf32>, vector<8x64xf32> -> vector<8x64xf32>
    %c0_93 = arith.constant 0 : index
    %c1_94 = arith.constant 1 : index
    %c1_95 = arith.constant 1 : index
    %c0_96 = arith.constant 0 : index
    %c0_97 = arith.constant 0 : index
    %109 = vector.load %arg8[%c0_93, %c1_94, %c1_95, %c0_96, %c0_97] : memref<2x2x2x1x64xf32, #tpu.memory_space<vmem>>, vector<1x1x1x1x64xf32>
    %110 = vector.shape_cast %109 : vector<1x1x1x1x64xf32> to vector<1x64xf32>
    %111 = vector.broadcast %110 : vector<1x64xf32> to vector<8x64xf32>
    %112 = arith.addf %108, %111 : vector<8x64xf32>
    %cst_98 = arith.constant 0.000000e+00 : f32
    %113 = vector.broadcast %cst_98 : f32 to vector<8x64xf32>
    %114 = arith.cmpf oge, %112, %113 : vector<8x64xf32>
    %cst_99 = arith.constant 0.00999999977 : f32
    %115 = vector.broadcast %cst_99 : f32 to vector<8x64xf32>
    %116 = arith.mulf %115, %112 : vector<8x64xf32>
    %117 = arith.select %114, %112, %116 : vector<8x64xi1>, vector<8x64xf32>
    %c0_100 = arith.constant 0 : index
    %c1_101 = arith.constant 1 : index
    %c0_102 = arith.constant 0 : index
    %c0_103 = arith.constant 0 : index
    %118 = vector.load %arg9[%c0_100, %c1_101, %c0_102, %c0_103] : memref<2x2x64x16xf32, #tpu.memory_space<vmem>>, vector<1x1x64x16xf32>
    %119 = vector.shape_cast %118 : vector<1x1x64x16xf32> to vector<64x16xf32>
    %cst_104 = arith.constant dense<0.000000e+00> : vector<8x16xf32>
    %120 = tpu.matmul %117, %119, %cst_104 {dimension_numbers = #tpu.dot_dimension_numbers<[1], [0], [0], [1], [0, 0, 1, 1], [], []>} : vector<8x64xf32>, vector<64x16xf32>, vector<8x16xf32> -> vector<8x16xf32>
    %c0_105 = arith.constant 0 : index
    %c1_106 = arith.constant 1 : index
    %c0_107 = arith.constant 0 : index
    %c0_108 = arith.constant 0 : index
    %121 = vector.load %arg10[%c0_105, %c1_106, %c0_107, %c0_108] : memref<2x2x1x16xf32, #tpu.memory_space<vmem>>, vector<1x1x1x16xf32>
    %122 = vector.shape_cast %121 : vector<1x1x1x16xf32> to vector<1x16xf32>
    %123 = vector.broadcast %122 : vector<1x16xf32> to vector<8x16xf32>
    %124 = arith.addf %120, %123 : vector<8x16xf32>
    %125 = vector.extract_strided_slice %124 {offsets = [0, 0], sizes = [8, 8], strides = [1, 1]} : vector<8x16xf32> to vector<8x8xf32>
    %126 = math.tanh %125 : vector<8x8xf32>
    %127 = vector.extract_strided_slice %124 {offsets = [0, 8], sizes = [8, 8], strides = [1, 1]} : vector<8x16xf32> to vector<8x8xf32>
    %128 = math.exp %126 : vector<8x8xf32>
    %129 = arith.mulf %24, %128 : vector<8x8xf32>
    %130 = arith.addf %129, %127 : vector<8x8xf32>
    %cst_109 = arith.constant dense<0.000000e+00> : vector<8xf32>
    %131 = vector.multi_reduction <add>, %126, %cst_109 [1] : vector<8x8xf32> to vector<8xf32>
    %132 = vector.shape_cast %131 : vector<8xf32> to vector<8x1xf32>
    %133 = arith.addf %81, %132 : vector<8x1xf32>
    %c0_110 = arith.constant 0 : index
    %c0_111 = arith.constant 0 : index
    %c0_112 = arith.constant 0 : index
    %134 = vector.load %arg11[%c0_110, %c0_111, %c0_112] : memref<2x8x8xf32, #tpu.memory_space<vmem>>, vector<1x8x8xf32>
    %135 = vector.shape_cast %134 : vector<1x8x8xf32> to vector<8x8xf32>
    %cst_113 = arith.constant dense<0.000000e+00> : vector<8x8xf32>
    %136 = tpu.matmul %78, %135, %cst_113 {dimension_numbers = #tpu.dot_dimension_numbers<[1], [0], [0], [1], [0, 0, 1, 1], [], []>} : vector<8x8xf32>, vector<8x8xf32>, vector<8x8xf32> -> vector<8x8xf32>
    %c0_114 = arith.constant 0 : index
    %c0_115 = arith.constant 0 : index
    %c0_116 = arith.constant 0 : index
    %137 = vector.load %arg13[%c0_114, %c0_115, %c0_116] : memref<2x8x8xf32, #tpu.memory_space<vmem>>, vector<1x8x8xf32>
    %138 = vector.shape_cast %137 : vector<1x8x8xf32> to vector<8x8xf32>
    %cst_117 = arith.constant dense<0.000000e+00> : vector<8x8xf32>
    %139 = tpu.matmul %130, %138, %cst_117 {dimension_numbers = #tpu.dot_dimension_numbers<[1], [0], [0], [1], [0, 0, 1, 1], [], []>} : vector<8x8xf32>, vector<8x8xf32>, vector<8x8xf32> -> vector<8x8xf32>
    %140 = arith.addf %136, %139 : vector<8x8xf32>
    %c0_118 = arith.constant 0 : index
    %c0_119 = arith.constant 0 : index
    %c0_120 = arith.constant 0 : index
    %141 = vector.load %arg12[%c0_118, %c0_119, %c0_120] : memref<2x8x8xf32, #tpu.memory_space<vmem>>, vector<1x8x8xf32>
    %142 = vector.shape_cast %141 : vector<1x8x8xf32> to vector<8x8xf32>
    %cst_121 = arith.constant dense<0.000000e+00> : vector<8x8xf32>
    %143 = tpu.matmul %78, %142, %cst_121 {dimension_numbers = #tpu.dot_dimension_numbers<[1], [0], [0], [1], [0, 0, 1, 1], [], []>} : vector<8x8xf32>, vector<8x8xf32>, vector<8x8xf32> -> vector<8x8xf32>
    %c0_122 = arith.constant 0 : index
    %c0_123 = arith.constant 0 : index
    %c0_124 = arith.constant 0 : index
    %144 = vector.load %arg14[%c0_122, %c0_123, %c0_124] : memref<2x8x8xf32, #tpu.memory_space<vmem>>, vector<1x8x8xf32>
    %145 = vector.shape_cast %144 : vector<1x8x8xf32> to vector<8x8xf32>
    %cst_125 = arith.constant dense<0.000000e+00> : vector<8x8xf32>
    %146 = tpu.matmul %130, %145, %cst_125 {dimension_numbers = #tpu.dot_dimension_numbers<[1], [0], [0], [1], [0, 0, 1, 1], [], []>} : vector<8x8xf32>, vector<8x8xf32>, vector<8x8xf32> -> vector<8x8xf32>
    %147 = arith.addf %143, %146 : vector<8x8xf32>
    %c1_126 = arith.constant 1 : index
    %c0_127 = arith.constant 0 : index
    %c0_128 = arith.constant 0 : index
    %148 = vector.load %arg3[%c1_126, %c0_127, %c0_128] : memref<2x1x8xf32, #tpu.memory_space<vmem>>, vector<1x1x8xf32>
    %149 = vector.shape_cast %148 : vector<1x1x8xf32> to vector<1x8xf32>
    %c1_129 = arith.constant 1 : index
    %c0_130 = arith.constant 0 : index
    %c0_131 = arith.constant 0 : index
    %150 = vector.load %arg1[%c1_129, %c0_130, %c0_131] : memref<2x1x8xf32, #tpu.memory_space<vmem>>, vector<1x1x8xf32>
    %151 = vector.shape_cast %150 : vector<1x1x8xf32> to vector<1x8xf32>
    %152 = vector.broadcast %151 : vector<1x8xf32> to vector<8x8xf32>
    %153 = arith.addf %140, %152 : vector<8x8xf32>
    %154 = vector.broadcast %149 : vector<1x8xf32> to vector<8x8xf32>
    %155 = arith.mulf %154, %153 : vector<8x8xf32>
    %c1_132 = arith.constant 1 : index
    %c0_133 = arith.constant 0 : index
    %c0_134 = arith.constant 0 : index
    %156 = vector.load %arg4[%c1_132, %c0_133, %c0_134] : memref<2x1x8xf32, #tpu.memory_space<vmem>>, vector<1x1x8xf32>
    %157 = vector.shape_cast %156 : vector<1x1x8xf32> to vector<1x8xf32>
    %c1_135 = arith.constant 1 : index
    %c0_136 = arith.constant 0 : index
    %c0_137 = arith.constant 0 : index
    %158 = vector.load %arg2[%c1_135, %c0_136, %c0_137] : memref<2x1x8xf32, #tpu.memory_space<vmem>>, vector<1x1x8xf32>
    %159 = vector.shape_cast %158 : vector<1x1x8xf32> to vector<1x8xf32>
    %160 = vector.broadcast %159 : vector<1x8xf32> to vector<8x8xf32>
    %161 = arith.addf %147, %160 : vector<8x8xf32>
    %162 = vector.broadcast %157 : vector<1x8xf32> to vector<8x8xf32>
    %163 = arith.mulf %162, %161 : vector<8x8xf32>
    %cst_138 = arith.constant 0.000000e+00 : f32
    %164 = vector.broadcast %cst_138 : f32 to vector<8x8xf32>
    %165 = arith.cmpf oge, %155, %164 : vector<8x8xf32>
    %cst_139 = arith.constant 0.899999976 : f32
    %166 = vector.broadcast %cst_139 : f32 to vector<8x8xf32>
    %167 = arith.mulf %166, %155 : vector<8x8xf32>
    %168 = arith.select %165, %155, %167 : vector<8x8xi1>, vector<8x8xf32>
    %cst_140 = arith.constant 0.000000e+00 : f32
    %169 = vector.broadcast %cst_140 : f32 to vector<8x8xf32>
    %170 = arith.cmpf oge, %163, %169 : vector<8x8xf32>
    %cst_141 = arith.constant 0.899999976 : f32
    %171 = vector.broadcast %cst_141 : f32 to vector<8x8xf32>
    %172 = arith.mulf %171, %163 : vector<8x8xf32>
    %173 = arith.select %170, %163, %172 : vector<8x8xi1>, vector<8x8xf32>
    %c1_142 = arith.constant 1 : index
    %c0_143 = arith.constant 0 : index
    %c0_144 = arith.constant 0 : index
    %c0_145 = arith.constant 0 : index
    %174 = vector.load %arg5[%c1_142, %c0_143, %c0_144, %c0_145] : memref<2x2x8x64xf32, #tpu.memory_space<vmem>>, vector<1x1x8x64xf32>
    %175 = vector.shape_cast %174 : vector<1x1x8x64xf32> to vector<8x64xf32>
    %cst_146 = arith.constant dense<0.000000e+00> : vector<8x64xf32>
    %176 = tpu.matmul %168, %175, %cst_146 {dimension_numbers = #tpu.dot_dimension_numbers<[1], [0], [0], [1], [0, 0, 1, 1], [], []>} : vector<8x8xf32>, vector<8x64xf32>, vector<8x64xf32> -> vector<8x64xf32>
    %c1_147 = arith.constant 1 : index
    %c0_148 = arith.constant 0 : index
    %c0_149 = arith.constant 0 : index
    %c0_150 = arith.constant 0 : index
    %177 = vector.load %arg6[%c1_147, %c0_148, %c0_149, %c0_150] : memref<2x2x1x64xf32, #tpu.memory_space<vmem>>, vector<1x1x1x64xf32>
    %178 = vector.shape_cast %177 : vector<1x1x1x64xf32> to vector<1x64xf32>
    %179 = vector.broadcast %178 : vector<1x64xf32> to vector<8x64xf32>
    %180 = arith.addf %176, %179 : vector<8x64xf32>
    %cst_151 = arith.constant 0.000000e+00 : f32
    %181 = vector.broadcast %cst_151 : f32 to vector<8x64xf32>
    %182 = arith.cmpf oge, %180, %181 : vector<8x64xf32>
    %cst_152 = arith.constant 0.00999999977 : f32
    %183 = vector.broadcast %cst_152 : f32 to vector<8x64xf32>
    %184 = arith.mulf %183, %180 : vector<8x64xf32>
    %185 = arith.select %182, %180, %184 : vector<8x64xi1>, vector<8x64xf32>
    %c1_153 = arith.constant 1 : index
    %c0_154 = arith.constant 0 : index
    %c0_155 = arith.constant 0 : index
    %c0_156 = arith.constant 0 : index
    %c0_157 = arith.constant 0 : index
    %186 = vector.load %arg7[%c1_153, %c0_154, %c0_155, %c0_156, %c0_157] : memref<2x2x2x64x64xf32, #tpu.memory_space<vmem>>, vector<1x1x1x64x64xf32>
    %187 = vector.shape_cast %186 : vector<1x1x1x64x64xf32> to vector<64x64xf32>
    %cst_158 = arith.constant dense<0.000000e+00> : vector<8x64xf32>
    %188 = tpu.matmul %185, %187, %cst_158 {dimension_numbers = #tpu.dot_dimension_numbers<[1], [0], [0], [1], [0, 0, 1, 1], [], []>} : vector<8x64xf32>, vector<64x64xf32>, vector<8x64xf32> -> vector<8x64xf32>
    %c1_159 = arith.constant 1 : index
    %c0_160 = arith.constant 0 : index
    %c0_161 = arith.constant 0 : index
    %c0_162 = arith.constant 0 : index
    %c0_163 = arith.constant 0 : index
    %189 = vector.load %arg8[%c1_159, %c0_160, %c0_161, %c0_162, %c0_163] : memref<2x2x2x1x64xf32, #tpu.memory_space<vmem>>, vector<1x1x1x1x64xf32>
    %190 = vector.shape_cast %189 : vector<1x1x1x1x64xf32> to vector<1x64xf32>
    %191 = vector.broadcast %190 : vector<1x64xf32> to vector<8x64xf32>
    %192 = arith.addf %188, %191 : vector<8x64xf32>
    %cst_164 = arith.constant 0.000000e+00 : f32
    %193 = vector.broadcast %cst_164 : f32 to vector<8x64xf32>
    %194 = arith.cmpf oge, %192, %193 : vector<8x64xf32>
    %cst_165 = arith.constant 0.00999999977 : f32
    %195 = vector.broadcast %cst_165 : f32 to vector<8x64xf32>
    %196 = arith.mulf %195, %192 : vector<8x64xf32>
    %197 = arith.select %194, %192, %196 : vector<8x64xi1>, vector<8x64xf32>
    %c1_166 = arith.constant 1 : index
    %c0_167 = arith.constant 0 : index
    %c1_168 = arith.constant 1 : index
    %c0_169 = arith.constant 0 : index
    %c0_170 = arith.constant 0 : index
    %198 = vector.load %arg7[%c1_166, %c0_167, %c1_168, %c0_169, %c0_170] : memref<2x2x2x64x64xf32, #tpu.memory_space<vmem>>, vector<1x1x1x64x64xf32>
    %199 = vector.shape_cast %198 : vector<1x1x1x64x64xf32> to vector<64x64xf32>
    %cst_171 = arith.constant dense<0.000000e+00> : vector<8x64xf32>
    %200 = tpu.matmul %197, %199, %cst_171 {dimension_numbers = #tpu.dot_dimension_numbers<[1], [0], [0], [1], [0, 0, 1, 1], [], []>} : vector<8x64xf32>, vector<64x64xf32>, vector<8x64xf32> -> vector<8x64xf32>
    %c1_172 = arith.constant 1 : index
    %c0_173 = arith.constant 0 : index
    %c1_174 = arith.constant 1 : index
    %c0_175 = arith.constant 0 : index
    %c0_176 = arith.constant 0 : index
    %201 = vector.load %arg8[%c1_172, %c0_173, %c1_174, %c0_175, %c0_176] : memref<2x2x2x1x64xf32, #tpu.memory_space<vmem>>, vector<1x1x1x1x64xf32>
    %202 = vector.shape_cast %201 : vector<1x1x1x1x64xf32> to vector<1x64xf32>
    %203 = vector.broadcast %202 : vector<1x64xf32> to vector<8x64xf32>
    %204 = arith.addf %200, %203 : vector<8x64xf32>
    %cst_177 = arith.constant 0.000000e+00 : f32
    %205 = vector.broadcast %cst_177 : f32 to vector<8x64xf32>
    %206 = arith.cmpf oge, %204, %205 : vector<8x64xf32>
    %cst_178 = arith.constant 0.00999999977 : f32
    %207 = vector.broadcast %cst_178 : f32 to vector<8x64xf32>
    %208 = arith.mulf %207, %204 : vector<8x64xf32>
    %209 = arith.select %206, %204, %208 : vector<8x64xi1>, vector<8x64xf32>
    %c1_179 = arith.constant 1 : index
    %c0_180 = arith.constant 0 : index
    %c0_181 = arith.constant 0 : index
    %c0_182 = arith.constant 0 : index
    %210 = vector.load %arg9[%c1_179, %c0_180, %c0_181, %c0_182] : memref<2x2x64x16xf32, #tpu.memory_space<vmem>>, vector<1x1x64x16xf32>
    %211 = vector.shape_cast %210 : vector<1x1x64x16xf32> to vector<64x16xf32>
    %cst_183 = arith.constant dense<0.000000e+00> : vector<8x16xf32>
    %212 = tpu.matmul %209, %211, %cst_183 {dimension_numbers = #tpu.dot_dimension_numbers<[1], [0], [0], [1], [0, 0, 1, 1], [], []>} : vector<8x64xf32>, vector<64x16xf32>, vector<8x16xf32> -> vector<8x16xf32>
    %c1_184 = arith.constant 1 : index
    %c0_185 = arith.constant 0 : index
    %c0_186 = arith.constant 0 : index
    %c0_187 = arith.constant 0 : index
    %213 = vector.load %arg10[%c1_184, %c0_185, %c0_186, %c0_187] : memref<2x2x1x16xf32, #tpu.memory_space<vmem>>, vector<1x1x1x16xf32>
    %214 = vector.shape_cast %213 : vector<1x1x1x16xf32> to vector<1x16xf32>
    %215 = vector.broadcast %214 : vector<1x16xf32> to vector<8x16xf32>
    %216 = arith.addf %212, %215 : vector<8x16xf32>
    %217 = vector.extract_strided_slice %216 {offsets = [0, 0], sizes = [8, 8], strides = [1, 1]} : vector<8x16xf32> to vector<8x8xf32>
    %218 = math.tanh %217 : vector<8x8xf32>
    %219 = vector.extract_strided_slice %216 {offsets = [0, 8], sizes = [8, 8], strides = [1, 1]} : vector<8x16xf32> to vector<8x8xf32>
    %220 = math.exp %218 : vector<8x8xf32>
    %221 = arith.mulf %173, %220 : vector<8x8xf32>
    %222 = arith.addf %221, %219 : vector<8x8xf32>
    %cst_188 = arith.constant dense<0.000000e+00> : vector<8xf32>
    %223 = vector.multi_reduction <add>, %218, %cst_188 [1] : vector<8x8xf32> to vector<8xf32>
    %224 = vector.shape_cast %223 : vector<8xf32> to vector<8x1xf32>
    %225 = arith.addf %133, %224 : vector<8x1xf32>
    %c1_189 = arith.constant 1 : index
    %c1_190 = arith.constant 1 : index
    %c0_191 = arith.constant 0 : index
    %c0_192 = arith.constant 0 : index
    %226 = vector.load %arg5[%c1_189, %c1_190, %c0_191, %c0_192] : memref<2x2x8x64xf32, #tpu.memory_space<vmem>>, vector<1x1x8x64xf32>
    %227 = vector.shape_cast %226 : vector<1x1x8x64xf32> to vector<8x64xf32>
    %cst_193 = arith.constant dense<0.000000e+00> : vector<8x64xf32>
    %228 = tpu.matmul %222, %227, %cst_193 {dimension_numbers = #tpu.dot_dimension_numbers<[1], [0], [0], [1], [0, 0, 1, 1], [], []>} : vector<8x8xf32>, vector<8x64xf32>, vector<8x64xf32> -> vector<8x64xf32>
    %c1_194 = arith.constant 1 : index
    %c1_195 = arith.constant 1 : index
    %c0_196 = arith.constant 0 : index
    %c0_197 = arith.constant 0 : index
    %229 = vector.load %arg6[%c1_194, %c1_195, %c0_196, %c0_197] : memref<2x2x1x64xf32, #tpu.memory_space<vmem>>, vector<1x1x1x64xf32>
    %230 = vector.shape_cast %229 : vector<1x1x1x64xf32> to vector<1x64xf32>
    %231 = vector.broadcast %230 : vector<1x64xf32> to vector<8x64xf32>
    %232 = arith.addf %228, %231 : vector<8x64xf32>
    %cst_198 = arith.constant 0.000000e+00 : f32
    %233 = vector.broadcast %cst_198 : f32 to vector<8x64xf32>
    %234 = arith.cmpf oge, %232, %233 : vector<8x64xf32>
    %cst_199 = arith.constant 0.00999999977 : f32
    %235 = vector.broadcast %cst_199 : f32 to vector<8x64xf32>
    %236 = arith.mulf %235, %232 : vector<8x64xf32>
    %237 = arith.select %234, %232, %236 : vector<8x64xi1>, vector<8x64xf32>
    %c1_200 = arith.constant 1 : index
    %c1_201 = arith.constant 1 : index
    %c0_202 = arith.constant 0 : index
    %c0_203 = arith.constant 0 : index
    %c0_204 = arith.constant 0 : index
    %238 = vector.load %arg7[%c1_200, %c1_201, %c0_202, %c0_203, %c0_204] : memref<2x2x2x64x64xf32, #tpu.memory_space<vmem>>, vector<1x1x1x64x64xf32>
    %239 = vector.shape_cast %238 : vector<1x1x1x64x64xf32> to vector<64x64xf32>
    %cst_205 = arith.constant dense<0.000000e+00> : vector<8x64xf32>
    %240 = tpu.matmul %237, %239, %cst_205 {dimension_numbers = #tpu.dot_dimension_numbers<[1], [0], [0], [1], [0, 0, 1, 1], [], []>} : vector<8x64xf32>, vector<64x64xf32>, vector<8x64xf32> -> vector<8x64xf32>
    %c1_206 = arith.constant 1 : index
    %c1_207 = arith.constant 1 : index
    %c0_208 = arith.constant 0 : index
    %c0_209 = arith.constant 0 : index
    %c0_210 = arith.constant 0 : index
    %241 = vector.load %arg8[%c1_206, %c1_207, %c0_208, %c0_209, %c0_210] : memref<2x2x2x1x64xf32, #tpu.memory_space<vmem>>, vector<1x1x1x1x64xf32>
    %242 = vector.shape_cast %241 : vector<1x1x1x1x64xf32> to vector<1x64xf32>
    %243 = vector.broadcast %242 : vector<1x64xf32> to vector<8x64xf32>
    %244 = arith.addf %240, %243 : vector<8x64xf32>
    %cst_211 = arith.constant 0.000000e+00 : f32
    %245 = vector.broadcast %cst_211 : f32 to vector<8x64xf32>
    %246 = arith.cmpf oge, %244, %245 : vector<8x64xf32>
    %cst_212 = arith.constant 0.00999999977 : f32
    %247 = vector.broadcast %cst_212 : f32 to vector<8x64xf32>
    %248 = arith.mulf %247, %244 : vector<8x64xf32>
    %249 = arith.select %246, %244, %248 : vector<8x64xi1>, vector<8x64xf32>
    %c1_213 = arith.constant 1 : index
    %c1_214 = arith.constant 1 : index
    %c1_215 = arith.constant 1 : index
    %c0_216 = arith.constant 0 : index
    %c0_217 = arith.constant 0 : index
    %250 = vector.load %arg7[%c1_213, %c1_214, %c1_215, %c0_216, %c0_217] : memref<2x2x2x64x64xf32, #tpu.memory_space<vmem>>, vector<1x1x1x64x64xf32>
    %251 = vector.shape_cast %250 : vector<1x1x1x64x64xf32> to vector<64x64xf32>
    %cst_218 = arith.constant dense<0.000000e+00> : vector<8x64xf32>
    %252 = tpu.matmul %249, %251, %cst_218 {dimension_numbers = #tpu.dot_dimension_numbers<[1], [0], [0], [1], [0, 0, 1, 1], [], []>} : vector<8x64xf32>, vector<64x64xf32>, vector<8x64xf32> -> vector<8x64xf32>
    %c1_219 = arith.constant 1 : index
    %c1_220 = arith.constant 1 : index
    %c1_221 = arith.constant 1 : index
    %c0_222 = arith.constant 0 : index
    %c0_223 = arith.constant 0 : index
    %253 = vector.load %arg8[%c1_219, %c1_220, %c1_221, %c0_222, %c0_223] : memref<2x2x2x1x64xf32, #tpu.memory_space<vmem>>, vector<1x1x1x1x64xf32>
    %254 = vector.shape_cast %253 : vector<1x1x1x1x64xf32> to vector<1x64xf32>
    %255 = vector.broadcast %254 : vector<1x64xf32> to vector<8x64xf32>
    %256 = arith.addf %252, %255 : vector<8x64xf32>
    %cst_224 = arith.constant 0.000000e+00 : f32
    %257 = vector.broadcast %cst_224 : f32 to vector<8x64xf32>
    %258 = arith.cmpf oge, %256, %257 : vector<8x64xf32>
    %cst_225 = arith.constant 0.00999999977 : f32
    %259 = vector.broadcast %cst_225 : f32 to vector<8x64xf32>
    %260 = arith.mulf %259, %256 : vector<8x64xf32>
    %261 = arith.select %258, %256, %260 : vector<8x64xi1>, vector<8x64xf32>
    %c1_226 = arith.constant 1 : index
    %c1_227 = arith.constant 1 : index
    %c0_228 = arith.constant 0 : index
    %c0_229 = arith.constant 0 : index
    %262 = vector.load %arg9[%c1_226, %c1_227, %c0_228, %c0_229] : memref<2x2x64x16xf32, #tpu.memory_space<vmem>>, vector<1x1x64x16xf32>
    %263 = vector.shape_cast %262 : vector<1x1x64x16xf32> to vector<64x16xf32>
    %cst_230 = arith.constant dense<0.000000e+00> : vector<8x16xf32>
    %264 = tpu.matmul %261, %263, %cst_230 {dimension_numbers = #tpu.dot_dimension_numbers<[1], [0], [0], [1], [0, 0, 1, 1], [], []>} : vector<8x64xf32>, vector<64x16xf32>, vector<8x16xf32> -> vector<8x16xf32>
    %c1_231 = arith.constant 1 : index
    %c1_232 = arith.constant 1 : index
    %c0_233 = arith.constant 0 : index
    %c0_234 = arith.constant 0 : index
    %265 = vector.load %arg10[%c1_231, %c1_232, %c0_233, %c0_234] : memref<2x2x1x16xf32, #tpu.memory_space<vmem>>, vector<1x1x1x16xf32>
    %266 = vector.shape_cast %265 : vector<1x1x1x16xf32> to vector<1x16xf32>
    %267 = vector.broadcast %266 : vector<1x16xf32> to vector<8x16xf32>
    %268 = arith.addf %264, %267 : vector<8x16xf32>
    %269 = vector.extract_strided_slice %268 {offsets = [0, 0], sizes = [8, 8], strides = [1, 1]} : vector<8x16xf32> to vector<8x8xf32>
    %270 = math.tanh %269 : vector<8x8xf32>
    %271 = vector.extract_strided_slice %268 {offsets = [0, 8], sizes = [8, 8], strides = [1, 1]} : vector<8x16xf32> to vector<8x8xf32>
    %272 = math.exp %270 : vector<8x8xf32>
    %273 = arith.mulf %168, %272 : vector<8x8xf32>
    %274 = arith.addf %273, %271 : vector<8x8xf32>
    %cst_235 = arith.constant dense<0.000000e+00> : vector<8xf32>
    %275 = vector.multi_reduction <add>, %270, %cst_235 [1] : vector<8x8xf32> to vector<8xf32>
    %276 = vector.shape_cast %275 : vector<8xf32> to vector<8x1xf32>
    %277 = arith.addf %225, %276 : vector<8x1xf32>
    %c1_236 = arith.constant 1 : index
    %c0_237 = arith.constant 0 : index
    %c0_238 = arith.constant 0 : index
    %278 = vector.load %arg11[%c1_236, %c0_237, %c0_238] : memref<2x8x8xf32, #tpu.memory_space<vmem>>, vector<1x8x8xf32>
    %279 = vector.shape_cast %278 : vector<1x8x8xf32> to vector<8x8xf32>
    %cst_239 = arith.constant dense<0.000000e+00> : vector<8x8xf32>
    %280 = tpu.matmul %222, %279, %cst_239 {dimension_numbers = #tpu.dot_dimension_numbers<[1], [0], [0], [1], [0, 0, 1, 1], [], []>} : vector<8x8xf32>, vector<8x8xf32>, vector<8x8xf32> -> vector<8x8xf32>
    %c1_240 = arith.constant 1 : index
    %c0_241 = arith.constant 0 : index
    %c0_242 = arith.constant 0 : index
    %281 = vector.load %arg13[%c1_240, %c0_241, %c0_242] : memref<2x8x8xf32, #tpu.memory_space<vmem>>, vector<1x8x8xf32>
    %282 = vector.shape_cast %281 : vector<1x8x8xf32> to vector<8x8xf32>
    %cst_243 = arith.constant dense<0.000000e+00> : vector<8x8xf32>
    %283 = tpu.matmul %274, %282, %cst_243 {dimension_numbers = #tpu.dot_dimension_numbers<[1], [0], [0], [1], [0, 0, 1, 1], [], []>} : vector<8x8xf32>, vector<8x8xf32>, vector<8x8xf32> -> vector<8x8xf32>
    %284 = arith.addf %280, %283 : vector<8x8xf32>
    %c1_244 = arith.constant 1 : index
    %c0_245 = arith.constant 0 : index
    %c0_246 = arith.constant 0 : index
    %285 = vector.load %arg12[%c1_244, %c0_245, %c0_246] : memref<2x8x8xf32, #tpu.memory_space<vmem>>, vector<1x8x8xf32>
    %286 = vector.shape_cast %285 : vector<1x8x8xf32> to vector<8x8xf32>
    %cst_247 = arith.constant dense<0.000000e+00> : vector<8x8xf32>
    %287 = tpu.matmul %222, %286, %cst_247 {dimension_numbers = #tpu.dot_dimension_numbers<[1], [0], [0], [1], [0, 0, 1, 1], [], []>} : vector<8x8xf32>, vector<8x8xf32>, vector<8x8xf32> -> vector<8x8xf32>
    %c1_248 = arith.constant 1 : index
    %c0_249 = arith.constant 0 : index
    %c0_250 = arith.constant 0 : index
    %288 = vector.load %arg14[%c1_248, %c0_249, %c0_250] : memref<2x8x8xf32, #tpu.memory_space<vmem>>, vector<1x8x8xf32>
    %289 = vector.shape_cast %288 : vector<1x8x8xf32> to vector<8x8xf32>
    %cst_251 = arith.constant dense<0.000000e+00> : vector<8x8xf32>
    %290 = tpu.matmul %274, %289, %cst_251 {dimension_numbers = #tpu.dot_dimension_numbers<[1], [0], [0], [1], [0, 0, 1, 1], [], []>} : vector<8x8xf32>, vector<8x8xf32>, vector<8x8xf32> -> vector<8x8xf32>
    %291 = arith.addf %287, %290 : vector<8x8xf32>
    %c0_252 = arith.constant 0 : index
    %c0_253 = arith.constant 0 : index
    %292 = vector.load %arg15[%c0_252, %c0_253] : memref<1x1xf32, #tpu.memory_space<vmem>>, vector<1x1xf32>
    %293 = vector.broadcast %292 : vector<1x1xf32> to vector<8x1xf32>
    %294 = arith.addf %277, %293 : vector<8x1xf32>
    %295 = tpu.concatenate %284, %291 in 1 : vector<8x8xf32>, vector<8x8xf32> -> vector<8x16xf32>
    %c0_254 = arith.constant 0 : index
    %c0_255 = arith.constant 0 : index
    %296 = vector.load %arg16[%c0_254, %c0_255] : memref<8x16xf32, #tpu.memory_space<vmem>>, vector<8x16xf32>
    tpu.vector_store %arg16[%c0_254, %c0_255], %295 {strides = array<i32>} : memref<8x16xf32, #tpu.memory_space<vmem>>, vector<8x16xf32>,
    %c0_256 = arith.constant 0 : index
    %c0_257 = arith.constant 0 : index
    %297 = vector.load %arg17[%c0_256, %c0_257] : memref<8x1xf32, #tpu.memory_space<vmem>>, vector<8x1xf32>
    tpu.vector_store %arg17[%c0_256, %c0_257], %294 {strides = array<i32>} : memref<8x1xf32, #tpu.memory_space<vmem>>, vector<8x1xf32>,
    return
  }
}

</mosaic_0001>

<llo_original>
// kernel: tpu_custom_call.1
$region0: #{tpu_custom_call.1}
  #allocation0 [shape = 'u32[]', space=smem, size = 0x4, offset = 0x4, fixed_abs, tag = 'smem constant byte address 0x4 - core index']
  #allocation1 [shape = 'u32[144,128]{1,0:T(1,128)}', space=vmem, size = 0x12000, scoped, tag = 'internal scratch']
  #allocation2 [shape = 'f32[1,1]{1,0:T(1,128)S(1)}', space=vmem, size = 0x200, scoped, tag = 'scoped memory for tpu_custom_call.1']
  %s0 = inlined_call_operand.vmem [shape: f32[8,16], index: 0, kind: input, shape index: {}]
  %s1 = inlined_call_operand.vmem [shape: f32[2,1,8], index: 1, kind: input, shape index: {}]
  %s2 = inlined_call_operand.vmem [shape: f32[2,1,8], index: 2, kind: input, shape index: {}]
  %s3 = inlined_call_operand.vmem [shape: f32[2,1,8], index: 3, kind: input, shape index: {}]
  %s4 = inlined_call_operand.vmem [shape: f32[2,1,8], index: 4, kind: input, shape index: {}]
  %s5 = inlined_call_operand.vmem [shape: f32[2,2,8,64], index: 5, kind: input, shape index: {}]
  %s6 = inlined_call_operand.vmem [shape: f32[2,2,1,64], index: 6, kind: input, shape index: {}]
  %s7 = inlined_call_operand.hbm [shape: f32[2,2,2,64,64], index: 7, kind: input, shape index: {}]
  %s8 = inlined_call_operand.vmem [shape: f32[2,2,2,1,64], index: 8, kind: input, shape index: {}]
  %s9 = inlined_call_operand.vmem [shape: f32[2,2,64,16], index: 9, kind: input, shape index: {}]
  %s10 = inlined_call_operand.vmem [shape: f32[2,2,1,16], index: 10, kind: input, shape index: {}]
  %s11 = inlined_call_operand.vmem [shape: f32[2,8,8], index: 11, kind: input, shape index: {}]
  %s12 = inlined_call_operand.vmem [shape: f32[2,8,8], index: 12, kind: input, shape index: {}]
  %s13 = inlined_call_operand.vmem [shape: f32[2,8,8], index: 13, kind: input, shape index: {}]
  %s14 = inlined_call_operand.vmem [shape: f32[2,8,8], index: 14, kind: input, shape index: {}]
  %s15 = inlined_call_operand.<no memory space> [shape: f32[1,1], index: 15, kind: input, shape index: {}]
  %s16 = inlined_call_operand.hbm [shape: f32[8,16], index: 16, kind: output, shape index: {0}]
  %s17 = inlined_call_operand.vmem [shape: f32[8,1], index: 17, kind: output, shape index: {1}]
  %18 = xla_tuple %s16, %s17
  %s19 = sld [smem:[#allocation0]]
  $region86: #{tpu_custom_call.1} parent=0
    _
  %s21 = ssub.s32 1, %s19
  %s22 = scalar_select 0, %s21, %s19
  %v23 = vstv %s15
  %24 = vst [vmem:[#allocation2] sm:$0x1] %v23
  $region1: #{tpu_custom_call.1} parent=0
    #allocation3 [shape = 'u8[262144]{0}', space=vmem, size = 0x40000, scoped, tag = 'input window, operand 7, single buffered']
    #allocation4 [shape = 's32[1]{0}', space=sflag, size = 0x4, scoped, tag = 'scoped memory for tpu_custom_call.1']
    #allocation5 [shape = 's32[1]{0}', space=sflag, size = 0x4, scoped, tag = 'scoped memory for tpu_custom_call.1']
    #allocation6 [shape = 'u8[4096]{0}', space=vmem, size = 0x1000, scoped, tag = 'output window, operand 0, single buffered']
    %25 = vsyncpa [#allocation4], 0
    %26 = vsyncpa [#allocation5], 0
    // Predicated region
    $region2: #{tpu_custom_call.1} parent=1 // pred_check
      _
    $region3: #{tpu_custom_call.1} parent=1 // pred_check_branch
      %28 = sbr.rel (0) target = $region5
    $region4: #{tpu_custom_call.1} parent=1 // pred_region
      _
    $region5: #{tpu_custom_call.1} parent=1 // pred_fallthru
      _
    // Predicated region
    $region6: #{tpu_custom_call.1} parent=1 // pred_check
      _
    $region7: #{tpu_custom_call.1} parent=1 // pred_check_branch
      %30 = sbr.rel (0) target = $region9
    $region8: #{tpu_custom_call.1} parent=1 // pred_region
      _
    $region9: #{tpu_custom_call.1} parent=1 // pred_fallthru
      _
    // Predicated region
    $region10: #{tpu_custom_call.1} parent=1 // pred_check
      _
    $region11: #{tpu_custom_call.1} parent=1 // pred_check_branch
      %32 = sbr.rel (0) target = $region13
    $region12: #{tpu_custom_call.1} parent=1 // pred_region
      _
    $region13: #{tpu_custom_call.1} parent=1 // pred_fallthru
      _
    // Predicated region
    $region14: #{tpu_custom_call.1} parent=1 // pred_check
      _
    $region15: #{tpu_custom_call.1} parent=1 // pred_check_branch
      %34 = sbr.rel (0) target = $region17
    $region16: #{tpu_custom_call.1} parent=1 // pred_region
      _
    $region17: #{tpu_custom_call.1} parent=1 // pred_fallthru
      _
    // Predicated region
    $region18: #{tpu_custom_call.1} parent=1 // pred_check
      _
    $region19: #{tpu_custom_call.1} parent=1 // pred_check_branch
      %36 = sbr.rel (0) target = $region21
    $region20: #{tpu_custom_call.1} parent=1 // pred_region
      _
    $region21: #{tpu_custom_call.1} parent=1 // pred_fallthru
      _
    // Predicated region
    $region22: #{tpu_custom_call.1} parent=1 // pred_check
      _
    $region23: #{tpu_custom_call.1} parent=1 // pred_check_branch
      %38 = sbr.rel (0) target = $region25
    $region24: #{tpu_custom_call.1} parent=1 // pred_region
      _
    $region25: #{tpu_custom_call.1} parent=1 // pred_fallthru
      _
    // Predicated region
    $region26: #{tpu_custom_call.1} parent=1 // pred_check
      _
    $region27: #{tpu_custom_call.1} parent=1 // pred_check_branch
      %40 = sbr.rel (0) target = $region29
    $region28: #{tpu_custom_call.1} parent=1 // pred_region
      _
    $region29: #{tpu_custom_call.1} parent=1 // pred_fallthru
      _
    // Predicated region
    $region30: #{tpu_custom_call.1} parent=1 // pred_check
      _
    $region31: #{tpu_custom_call.1} parent=1 // pred_check_branch
      %42 = sbr.rel (0) target = $region33
    $region32: #{tpu_custom_call.1} parent=1 // pred_region
      %s44 = ssub.s32 8192, 8192
      %45 = vsyncadd [#allocation4], %s44
      %s46 = sshll.u32 [#allocation3], 4
      %s47 = int_to_ptr.vmem [resolvable:$true] %s46
      %52 = dma.hbm_to_vmem [thread:$0]  %s7, 8192, %s47, [#allocation4], 128, 128, 8
    $region33: #{tpu_custom_call.1} parent=1 // pred_fallthru
      _
    // Predicated region
    $region34: #{tpu_custom_call.1} parent=1 // pred_check
      _
    $region35: #{tpu_custom_call.1} parent=1 // pred_check_branch
      %54 = sbr.rel (0) target = $region37
    $region36: #{tpu_custom_call.1} parent=1 // pred_region
      _
    $region37: #{tpu_custom_call.1} parent=1 // pred_fallthru
      _
    // Predicated region
    $region38: #{tpu_custom_call.1} parent=1 // pred_check
      _
    $region39: #{tpu_custom_call.1} parent=1 // pred_check_branch
      %56 = sbr.rel (0) target = $region41
    $region40: #{tpu_custom_call.1} parent=1 // pred_region
      _
    $region41: #{tpu_custom_call.1} parent=1 // pred_fallthru
      _
    // Predicated region
    $region42: #{tpu_custom_call.1} parent=1 // pred_check
      _
    $region43: #{tpu_custom_call.1} parent=1 // pred_check_branch
      %58 = sbr.rel (0) target = $region45
    $region44: #{tpu_custom_call.1} parent=1 // pred_region
      _
    $region45: #{tpu_custom_call.1} parent=1 // pred_fallthru
      _
    // Predicated region
    $region46: #{tpu_custom_call.1} parent=1 // pred_check
      _
    $region47: #{tpu_custom_call.1} parent=1 // pred_check_branch
      %60 = sbr.rel (0) target = $region49
    $region48: #{tpu_custom_call.1} parent=1 // pred_region
      _
    $region49: #{tpu_custom_call.1} parent=1 // pred_fallthru
      _
    // Predicated region
    $region50: #{tpu_custom_call.1} parent=1 // pred_check
      _
    $region51: #{tpu_custom_call.1} parent=1 // pred_check_branch
      %62 = sbr.rel (0) target = $region53
    $region52: #{tpu_custom_call.1} parent=1 // pred_region
      _
    $region53: #{tpu_custom_call.1} parent=1 // pred_fallthru
      _
    // Predicated region
    $region54: #{tpu_custom_call.1} parent=1 // pred_check
      _
    $region55: #{tpu_custom_call.1} parent=1 // pred_check_branch
      %64 = sbr.rel (0) target = $region57
    $region56: #{tpu_custom_call.1} parent=1 // pred_region
      _
    $region57: #{tpu_custom_call.1} parent=1 // pred_fallthru
      _
    // Predicated region
    $region58: #{tpu_custom_call.1} parent=1 // pred_check
      _
    $region59: #{tpu_custom_call.1} parent=1 // pred_check_branch
      %66 = sbr.rel (0) target = $region61
    $region60: #{tpu_custom_call.1} parent=1 // pred_region
      _
    $region61: #{tpu_custom_call.1} parent=1 // pred_fallthru
      _
    // Predicated region
    $region62: #{tpu_custom_call.1} parent=1 // pred_check
      _
    $region63: #{tpu_custom_call.1} parent=1 // pred_check_branch
      %68 = sbr.rel (0) target = $region65
    $region64: #{tpu_custom_call.1} parent=1 // pred_region
      _
    $region65: #{tpu_custom_call.1} parent=1 // pred_fallthru
      _
    // Predicated region
    $region66: #{tpu_custom_call.1} parent=1 // pred_check
      _
    $region67: #{tpu_custom_call.1} parent=1 // pred_check_branch
      %70 = sbr.rel (0) target = $region69
    $region68: #{tpu_custom_call.1} parent=1 // pred_region
      %71 = dma.done [#allocation4], 8192
    $region69: #{tpu_custom_call.1} parent=1 // pred_fallthru
      _
    %v72 = vld [vmem:[%s0] sm:$0xff]
    %v73 = vld [vmem:[%s3] sm:$0x1]
    %v74 = vld [vmem:[%s1] sm:$0x1]
    %v76 = vlaneseq
    %v77 = vshrl.u32 %v76, 7
    %v78 = vsub.s32 0, %v77
    %v79 = vrot.slane %v74, %v78
    %v81 = vadd.f32 %v72, %v79
    %v83 = vlaneseq
    %v84 = vshrl.u32 %v83, 7
    %v85 = vsub.s32 0, %v84
    %v86 = vrot.slane %v73, %v85
    %v88 = vmul.f32 %v86, %v81
    %v89 = vld [vmem:[%s4] sm:$0x1]
    %v90 = vld [vmem:[%s2] sm:$0x1]
    %v92 = vlaneseq
    %v93 = vshrl.u32 %v92, 7
    %v94 = vsub.s32 0, %v93
    %v95 = vrot.slane %v90, %v94
    %96 = vrot.lane.b32.xlu0 %v95, 8
    %v97 = vpop.permute.xlu0 %96
    %v99 = vadd.f32 %v72, %v97
    %v101 = vlaneseq
    %v102 = vshrl.u32 %v101, 7
    %v103 = vsub.s32 0, %v102
    %v104 = vrot.slane %v89, %v103
    %107 = vrot.lane.b32.xlu0 %v99, 120
    %v108 = vpop.permute.xlu0 %107
    %v110 = vmul.f32 %v104, %v108
    %vm111 = vcmp.ge.f32.partialorder %v88, 0.0
    %v112 = vmul.f32 %v88, 0.9
    %v113 = vsel %vm111, %v88, %v112
    %vm114 = vcmp.ge.f32.partialorder %v110, 0.0
    %v115 = vmul.f32 %v110, 0.9
    %v116 = vsel %vm114, %v110, %v115
    %v117 = vld [vmem:[%s5] sm:$0xff]
    %v118 = vld [vmem:[%s6] sm:$0x1]
    %v120 = vlaneseq
    %v121 = vshrl.u32 %v120, 7
    %v122 = vsub.s32 0, %v121
    %v123 = vrot.slane %v118, %v122
    %vm125 = vcmask 64512
    %v127 = vsel %vm125, %v113, 0
    %129 = vmatprep.subr.mxu0 0.0
    %130 = vmatpush1.msra.mxu0 %v117
    %131 = vmatprep.subr.mxu0 0.0
    %132 = vmatpush1.msra.mxu0 0.0
    %133 = vmatprep.subr.mxu0 0.0
    %134 = vmatpush1.msra.mxu0 0.0
    %135 = vmatprep.subr.mxu0 0.0
    %136 = vmatpush1.msra.mxu0 0.0
    %137 = vmatprep.subr.mxu0 0.0
    %138 = vmatpush1.msra.mxu0 0.0
    %139 = vmatprep.subr.mxu0 0.0
    %140 = vmatpush1.msra.mxu0 0.0
    %141 = vmatprep.subr.mxu0 0.0
    %142 = vmatpush1.msra.mxu0 0.0
    %143 = vmatprep.subr.mxu0 0.0
    %144 = vmatpush1.msra.mxu0 0.0
    %145 = vmatprep.subr.mxu0 0.0
    %146 = vmatpush1.msra.mxu0 0.0
    %147 = vmatprep.subr.mxu0 0.0
    %148 = vmatpush1.msra.mxu0 0.0
    %149 = vmatprep.subr.mxu0 0.0
    %150 = vmatpush1.msra.mxu0 0.0
    %151 = vmatprep.subr.mxu0 0.0
    %152 = vmatpush1.msra.mxu0 0.0
    %153 = vmatprep.subr.mxu0 0.0
    %154 = vmatpush1.msra.mxu0 0.0
    %155 = vmatprep.subr.mxu0 0.0
    %156 = vmatpush1.msra.mxu0 0.0
    %157 = vmatprep.subr.mxu0 0.0
    %158 = vmatpush1.msra.mxu0 0.0
    %159 = vmatprep.subr.mxu0 0.0
    %160 = vmatpush1.msra.mxu0 0.0
    %161 = vmatprep.subr.mxu0 0.0
    %162 = vmatpush1.msra.mxu0 0.0
    %163 = vmatprep.subr.mxu0 0.0
    %164 = vmatpush1.msra.mxu0 0.0
    %165 = vmatprep.subr.mxu0 0.0
    %166 = vmatpush1.msra.mxu0 0.0
    %167 = vmatprep.subr.mxu0 0.0
    %168 = vmatpush1.msra.mxu0 0.0
    %169 = vmatprep.subr.mxu0 0.0
    %170 = vmatpush1.msra.mxu0 0.0
    %171 = vmatprep.subr.mxu0 0.0
    %172 = vmatpush1.msra.mxu0 0.0
    %173 = vmatprep.subr.mxu0 0.0
    %174 = vmatpush1.msra.mxu0 0.0
    %175 = vmatprep.subr.mxu0 0.0
    %176 = vmatpush1.msra.mxu0 0.0
    %177 = vmatprep.subr.mxu0 0.0
    %178 = vmatpush1.msra.mxu0 0.0
    %179 = vmatprep.subr.mxu0 0.0
    %180 = vmatpush1.msra.mxu0 0.0
    %181 = vmatprep.subr.mxu0 0.0
    %182 = vmatpush1.msra.mxu0 0.0
    %183 = vmatprep.subr.mxu0 0.0
    %184 = vmatpush1.msra.mxu0 0.0
    %185 = vmatprep.subr.mxu0 0.0
    %186 = vmatpush1.msra.mxu0 0.0
    %187 = vmatprep.subr.mxu0 0.0
    %188 = vmatpush1.msra.mxu0 0.0
    %189 = vmatprep.subr.mxu0 0.0
    %190 = vmatpush1.msra.mxu0 0.0
    %191 = vmatprep.subr.mxu0 0.0
    %192 = vmatpush1.msra.mxu0 0.0
    %193 = vmatprep.mubr.f32.mxu0 0.0
    %194 = vmatmul.mubr.f32.gmra.mrb[0].mxu0 %v127
    %v195 = vpop.f32.mrb[0].mxu0
    %v196 = vadd.f32 %v123, %v195
    %v197 = vpop.f32.mrb[0].mxu0
    %198 = vdwg.mxu0
    %vm199 = vcmp.ge.f32.partialorder %v196, 0.0
    %v200 = vmul.f32 %v196, 0.01
    %v201 = vsel %vm199, %v196, %v200
    %v202 = vld [vmem:[#allocation3] sm:$0xff]
    %v203 = vld [vmem:[#allocation3 + $0x8] sm:$0xff]
    %v204 = vld [vmem:[#allocation3 + $0x10] sm:$0xff]
    %v205 = vld [vmem:[#allocation3 + $0x18] sm:$0xff]
    %v206 = vld [vmem:[#allocation3 + $0x20] sm:$0xff]
    %v207 = vld [vmem:[#allocation3 + $0x28] sm:$0xff]
    %v208 = vld [vmem:[#allocation3 + $0x30] sm:$0xff]
    %v209 = vld [vmem:[#allocation3 + $0x38] sm:$0xff]
    %v210 = vld [vmem:[%s8] sm:$0x1]
    %v212 = vlaneseq
    %v213 = vshrl.u32 %v212, 7
    %v214 = vsub.s32 0, %v213
    %v215 = vrot.slane %v210, %v214
    %vm217 = vcmask 523264
    %v219 = vsel %vm217, %v201, 0
    %221 = vmatprep.subr.mxu0 0.0
    %222 = vmatpush1.msra.mxu0 %v202
    %223 = vmatprep.subr.mxu0 0.0
    %224 = vmatpush1.msra.mxu0 %v203
    %225 = vmatprep.subr.mxu0 0.0
    %226 = vmatpush1.msra.mxu0 %v204
    %227 = vmatprep.subr.mxu0 0.0
    %228 = vmatpush1.msra.mxu0 %v205
    %229 = vmatprep.subr.mxu0 0.0
    %230 = vmatpush1.msra.mxu0 %v206
    %231 = vmatprep.subr.mxu0 0.0
    %232 = vmatpush1.msra.mxu0 %v207
    %233 = vmatprep.subr.mxu0 0.0
    %234 = vmatpush1.msra.mxu0 %v208
    %235 = vmatprep.subr.mxu0 0.0
    %236 = vmatpush1.msra.mxu0 %v209
    %237 = vmatprep.subr.mxu0 0.0
    %238 = vmatpush1.msra.mxu0 0.0
    %239 = vmatprep.subr.mxu0 0.0
    %240 = vmatpush1.msra.mxu0 0.0
    %241 = vmatprep.subr.mxu0 0.0
    %242 = vmatpush1.msra.mxu0 0.0
    %243 = vmatprep.subr.mxu0 0.0
    %244 = vmatpush1.msra.mxu0 0.0
    %245 = vmatprep.subr.mxu0 0.0
    %246 = vmatpush1.msra.mxu0 0.0
    %247 = vmatprep.subr.mxu0 0.0
    %248 = vmatpush1.msra.mxu0 0.0
    %249 = vmatprep.subr.mxu0 0.0
    %250 = vmatpush1.msra.mxu0 0.0
    %251 = vmatprep.subr.mxu0 0.0
    %252 = vmatpush1.msra.mxu0 0.0
    %253 = vmatprep.subr.mxu0 0.0
    %254 = vmatpush1.msra.mxu0 0.0
    %255 = vmatprep.subr.mxu0 0.0
    %256 = vmatpush1.msra.mxu0 0.0
    %257 = vmatprep.subr.mxu0 0.0
    %258 = vmatpush1.msra.mxu0 0.0
    %259 = vmatprep.subr.mxu0 0.0
    %260 = vmatpush1.msra.mxu0 0.0
    %261 = vmatprep.subr.mxu0 0.0
    %262 = vmatpush1.msra.mxu0 0.0
    %263 = vmatprep.subr.mxu0 0.0
    %264 = vmatpush1.msra.mxu0 0.0
    %265 = vmatprep.subr.mxu0 0.0
    %266 = vmatpush1.msra.mxu0 0.0
    %267 = vmatprep.subr.mxu0 0.0
    %268 = vmatpush1.msra.mxu0 0.0
    %269 = vmatprep.subr.mxu0 0.0
    %270 = vmatpush1.msra.mxu0 0.0
    %271 = vmatprep.subr.mxu0 0.0
    %272 = vmatpush1.msra.mxu0 0.0
    %273 = vmatprep.subr.mxu0 0.0
    %274 = vmatpush1.msra.mxu0 0.0
    %275 = vmatprep.subr.mxu0 0.0
    %276 = vmatpush1.msra.mxu0 0.0
    %277 = vmatprep.subr.mxu0 0.0
    %278 = vmatpush1.msra.mxu0 0.0
    %279 = vmatprep.subr.mxu0 0.0
    %280 = vmatpush1.msra.mxu0 0.0
    %281 = vmatprep.subr.mxu0 0.0
    %282 = vmatpush1.msra.mxu0 0.0
    %283 = vmatprep.subr.mxu0 0.0
    %284 = vmatpush1.msra.mxu0 0.0
    %285 = vmatprep.mubr.f32.mxu0 0.0
    %286 = vmatmul.mubr.f32.gmra.mrb[0].mxu0 %v219
    %v287 = vpop.f32.mrb[0].mxu0
    %v288 = vadd.f32 %v215, %v287
    %v289 = vpop.f32.mrb[0].mxu0
    %290 = vdwg.mxu0
    %vm291 = vcmp.ge.f32.partialorder %v288, 0.0
    %v292 = vmul.f32 %v288, 0.01
    %v293 = vsel %vm291, %v288, %v292
    %s294 = scalar_lea.vmem [#allocation3], 64
    %v295 = vld [vmem:[%s294] sm:$0xff]
    %v296 = vld [vmem:[%s294 + $0x8] sm:$0xff]
    %v297 = vld [vmem:[%s294 + $0x10] sm:$0xff]
    %v298 = vld [vmem:[%s294 + $0x18] sm:$0xff]
    %v299 = vld [vmem:[%s294 + $0x20] sm:$0xff]
    %v300 = vld [vmem:[%s294 + $0x28] sm:$0xff]
    %v301 = vld [vmem:[%s294 + $0x30] sm:$0xff]
    %v302 = vld [vmem:[%s294 + $0x38] sm:$0xff]
    %s303 = scalar_lea.vmem %s8, 1
    %v304 = vld [vmem:[%s303] sm:$0x1]
    %v306 = vlaneseq
    %v307 = vshrl.u32 %v306, 7
    %v308 = vsub.s32 0, %v307
    %v309 = vrot.slane %v304, %v308
    %v312 = vsel %vm217, %v293, 0
    %314 = vmatprep.subr.mxu0 0.0
    %315 = vmatpush1.msra.mxu0 %v295
    %316 = vmatprep.subr.mxu0 0.0
    %317 = vmatpush1.msra.mxu0 %v296
    %318 = vmatprep.subr.mxu0 0.0
    %319 = vmatpush1.msra.mxu0 %v297
    %320 = vmatprep.subr.mxu0 0.0
    %321 = vmatpush1.msra.mxu0 %v298
    %322 = vmatprep.subr.mxu0 0.0
    %323 = vmatpush1.msra.mxu0 %v299
    %324 = vmatprep.subr.mxu0 0.0
    %325 = vmatpush1.msra.mxu0 %v300
    %326 = vmatprep.subr.mxu0 0.0
    %327 = vmatpush1.msra.mxu0 %v301
    %328 = vmatprep.subr.mxu0 0.0
    %329 = vmatpush1.msra.mxu0 %v302
    %330 = vmatprep.subr.mxu0 0.0
    %331 = vmatpush1.msra.mxu0 0.0
    %332 = vmatprep.subr.mxu0 0.0
    %333 = vmatpush1.msra.mxu0 0.0
    %334 = vmatprep.subr.mxu0 0.0
    %335 = vmatpush1.msra.mxu0 0.0
    %336 = vmatprep.subr.mxu0 0.0
    %337 = vmatpush1.msra.mxu0 0.0
    %338 = vmatprep.subr.mxu0 0.0
    %339 = vmatpush1.msra.mxu0 0.0
    %340 = vmatprep.subr.mxu0 0.0
    %341 = vmatpush1.msra.mxu0 0.0
    %342 = vmatprep.subr.mxu0 0.0
    %343 = vmatpush1.msra.mxu0 0.0
    %344 = vmatprep.subr.mxu0 0.0
    %345 = vmatpush1.msra.mxu0 0.0
    %346 = vmatprep.subr.mxu0 0.0
    %347 = vmatpush1.msra.mxu0 0.0
    %348 = vmatprep.subr.mxu0 0.0
    %349 = vmatpush1.msra.mxu0 0.0
    %350 = vmatprep.subr.mxu0 0.0
    %351 = vmatpush1.msra.mxu0 0.0
    %352 = vmatprep.subr.mxu0 0.0
    %353 = vmatpush1.msra.mxu0 0.0
    %354 = vmatprep.subr.mxu0 0.0
    %355 = vmatpush1.msra.mxu0 0.0
    %356 = vmatprep.subr.mxu0 0.0
    %357 = vmatpush1.msra.mxu0 0.0
    %358 = vmatprep.subr.mxu0 0.0
    %359 = vmatpush1.msra.mxu0 0.0
    %360 = vmatprep.subr.mxu0 0.0
    %361 = vmatpush1.msra.mxu0 0.0
    %362 = vmatprep.subr.mxu0 0.0
    %363 = vmatpush1.msra.mxu0 0.0
    %364 = vmatprep.subr.mxu0 0.0
    %365 = vmatpush1.msra.mxu0 0.0
    %366 = vmatprep.subr.mxu0 0.0
    %367 = vmatpush1.msra.mxu0 0.0
    %368 = vmatprep.subr.mxu0 0.0
    %369 = vmatpush1.msra.mxu0 0.0
    %370 = vmatprep.subr.mxu0 0.0
    %371 = vmatpush1.msra.mxu0 0.0
    %372 = vmatprep.subr.mxu0 0.0
    %373 = vmatpush1.msra.mxu0 0.0
    %374 = vmatprep.subr.mxu0 0.0
    %375 = vmatpush1.msra.mxu0 0.0
    %376 = vmatprep.subr.mxu0 0.0
    %377 = vmatpush1.msra.mxu0 0.0
    %378 = vmatprep.mubr.f32.mxu0 0.0
    %379 = vmatmul.mubr.f32.gmra.mrb[0].mxu0 %v312
    %v380 = vpop.f32.mrb[0].mxu0
    %v381 = vadd.f32 %v309, %v380
    %v382 = vpop.f32.mrb[0].mxu0
    %383 = vdwg.mxu0
    %vm384 = vcmp.ge.f32.partialorder %v381, 0.0
    %v385 = vmul.f32 %v381, 0.01
    %v386 = vsel %vm384, %v381, %v385
    %v387 = vld [vmem:[%s9] sm:$0xff]
    %v388 = vld [vmem:[%s9 + $0x8] sm:$0xff]
    %v389 = vld [vmem:[%s9 + $0x10] sm:$0xff]
    %v390 = vld [vmem:[%s9 + $0x18] sm:$0xff]
    %v391 = vld [vmem:[%s9 + $0x20] sm:$0xff]
    %v392 = vld [vmem:[%s9 + $0x28] sm:$0xff]
    %v393 = vld [vmem:[%s9 + $0x30] sm:$0xff]
    %v394 = vld [vmem:[%s9 + $0x38] sm:$0xff]
    %v395 = vld [vmem:[%s10] sm:$0x1]
    %v397 = vlaneseq
    %v398 = vshrl.u32 %v397, 7
    %v399 = vsub.s32 0, %v398
    %v400 = vrot.slane %v395, %v399
    %v403 = vsel %vm217, %v386, 0
    %405 = vmatprep.subr.mxu0 0.0
    %406 = vmatpush1.msra.mxu0 %v387
    %407 = vmatprep.subr.mxu0 0.0
    %408 = vmatpush1.msra.mxu0 %v388
    %409 = vmatprep.subr.mxu0 0.0
    %410 = vmatpush1.msra.mxu0 %v389
    %411 = vmatprep.subr.mxu0 0.0
    %412 = vmatpush1.msra.mxu0 %v390
    %413 = vmatprep.subr.mxu0 0.0
    %414 = vmatpush1.msra.mxu0 %v391
    %415 = vmatprep.subr.mxu0 0.0
    %416 = vmatpush1.msra.mxu0 %v392
    %417 = vmatprep.subr.mxu0 0.0
    %418 = vmatpush1.msra.mxu0 %v393
    %419 = vmatprep.subr.mxu0 0.0
    %420 = vmatpush1.msra.mxu0 %v394
    %421 = vmatprep.subr.mxu0 0.0
    %422 = vmatpush1.msra.mxu0 0.0
    %423 = vmatprep.subr.mxu0 0.0
    %424 = vmatpush1.msra.mxu0 0.0
    %425 = vmatprep.subr.mxu0 0.0
    %426 = vmatpush1.msra.mxu0 0.0
    %427 = vmatprep.subr.mxu0 0.0
    %428 = vmatpush1.msra.mxu0 0.0
    %429 = vmatprep.subr.mxu0 0.0
    %430 = vmatpush1.msra.mxu0 0.0
    %431 = vmatprep.subr.mxu0 0.0
    %432 = vmatpush1.msra.mxu0 0.0
    %433 = vmatprep.subr.mxu0 0.0
    %434 = vmatpush1.msra.mxu0 0.0
    %435 = vmatprep.subr.mxu0 0.0
    %436 = vmatpush1.msra.mxu0 0.0
    %437 = vmatprep.subr.mxu0 0.0
    %438 = vmatpush1.msra.mxu0 0.0
    %439 = vmatprep.subr.mxu0 0.0
    %440 = vmatpush1.msra.mxu0 0.0
    %441 = vmatprep.subr.mxu0 0.0
    %442 = vmatpush1.msra.mxu0 0.0
    %443 = vmatprep.subr.mxu0 0.0
    %444 = vmatpush1.msra.mxu0 0.0
    %445 = vmatprep.subr.mxu0 0.0
    %446 = vmatpush1.msra.mxu0 0.0
    %447 = vmatprep.subr.mxu0 0.0
    %448 = vmatpush1.msra.mxu0 0.0
    %449 = vmatprep.subr.mxu0 0.0
    %450 = vmatpush1.msra.mxu0 0.0
    %451 = vmatprep.subr.mxu0 0.0
    %452 = vmatpush1.msra.mxu0 0.0
    %453 = vmatprep.subr.mxu0 0.0
    %454 = vmatpush1.msra.mxu0 0.0
    %455 = vmatprep.subr.mxu0 0.0
    %456 = vmatpush1.msra.mxu0 0.0
    %457 = vmatprep.subr.mxu0 0.0
    %458 = vmatpush1.msra.mxu0 0.0
    %459 = vmatprep.subr.mxu0 0.0
    %460 = vmatpush1.msra.mxu0 0.0
    %461 = vmatprep.subr.mxu0 0.0
    %462 = vmatpush1.msra.mxu0 0.0
    %463 = vmatprep.subr.mxu0 0.0
    %464 = vmatpush1.msra.mxu0 0.0
    %465 = vmatprep.subr.mxu0 0.0
    %466 = vmatpush1.msra.mxu0 0.0
    %467 = vmatprep.subr.mxu0 0.0
    %468 = vmatpush1.msra.mxu0 0.0
    %469 = vmatprep.mubr.f32.mxu0 0.0
    %470 = vmatmul.mubr.f32.gmra.mrb[0].mxu0 %v403
    %v471 = vpop.f32.mrb[0].mxu0
    %v472 = vadd.f32 %v400, %v471
    %v473 = vpop.f32.mrb[0].mxu0
    %474 = vdwg.mxu0
    %v475 = vtanh.pop %v472
    %v476 = vmul.f32 %v475, 1.442695
    %v477 = vpow.pop %v476
    %v478 = vmul.f32 %v116, %v477
    %480 = vrot.lane.b32.xlu0 %v472, 120
    %v481 = vpop.permute.xlu0 %480
    %v483 = vadd.f32 %v478, %v481
    %v484 = vsel %vm125, %v475, 0.0
    %485 = vadd.xlane.f32.xlu0 %v484
    %v486 = vpop.xlane.xlu0 %485
    %v487 = vadd.f32 %v486, 0.0
    %s488 = scalar_lea.vmem %s5, 8
    %v489 = vld [vmem:[%s488] sm:$0xff]
    %s490 = scalar_lea.vmem %s6, 1
    %v491 = vld [vmem:[%s490] sm:$0x1]
    %v493 = vlaneseq
    %v494 = vshrl.u32 %v493, 7
    %v495 = vsub.s32 0, %v494
    %v496 = vrot.slane %v491, %v495
    %v499 = vsel %vm125, %v483, 0
    %501 = vmatprep.subr.mxu0 0.0
    %502 = vmatpush1.msra.mxu0 %v489
    %503 = vmatprep.subr.mxu0 0.0
    %504 = vmatpush1.msra.mxu0 0.0
    %505 = vmatprep.subr.mxu0 0.0
    %506 = vmatpush1.msra.mxu0 0.0
    %507 = vmatprep.subr.mxu0 0.0
    %508 = vmatpush1.msra.mxu0 0.0
    %509 = vmatprep.subr.mxu0 0.0
    %510 = vmatpush1.msra.mxu0 0.0
    %511 = vmatprep.subr.mxu0 0.0
    %512 = vmatpush1.msra.mxu0 0.0
    %513 = vmatprep.subr.mxu0 0.0
    %514 = vmatpush1.msra.mxu0 0.0
    %515 = vmatprep.subr.mxu0 0.0
    %516 = vmatpush1.msra.mxu0 0.0
    %517 = vmatprep.subr.mxu0 0.0
    %518 = vmatpush1.msra.mxu0 0.0
    %519 = vmatprep.subr.mxu0 0.0
    %520 = vmatpush1.msra.mxu0 0.0
    %521 = vmatprep.subr.mxu0 0.0
    %522 = vmatpush1.msra.mxu0 0.0
    %523 = vmatprep.subr.mxu0 0.0
    %524 = vmatpush1.msra.mxu0 0.0
    %525 = vmatprep.subr.mxu0 0.0
    %526 = vmatpush1.msra.mxu0 0.0
    %527 = vmatprep.subr.mxu0 0.0
    %528 = vmatpush1.msra.mxu0 0.0
    %529 = vmatprep.subr.mxu0 0.0
    %530 = vmatpush1.msra.mxu0 0.0
    %531 = vmatprep.subr.mxu0 0.0
    %532 = vmatpush1.msra.mxu0 0.0
    %533 = vmatprep.subr.mxu0 0.0
    %534 = vmatpush1.msra.mxu0 0.0
    %535 = vmatprep.subr.mxu0 0.0
    %536 = vmatpush1.msra.mxu0 0.0
    %537 = vmatprep.subr.mxu0 0.0
    %538 = vmatpush1.msra.mxu0 0.0
    %539 = vmatprep.subr.mxu0 0.0
    %540 = vmatpush1.msra.mxu0 0.0
    %541 = vmatprep.subr.mxu0 0.0
    %542 = vmatpush1.msra.mxu0 0.0
    %543 = vmatprep.subr.mxu0 0.0
    %544 = vmatpush1.msra.mxu0 0.0
    %545 = vmatprep.subr.mxu0 0.0
    %546 = vmatpush1.msra.mxu0 0.0
    %547 = vmatprep.subr.mxu0 0.0
    %548 = vmatpush1.msra.mxu0 0.0
    %549 = vmatprep.subr.mxu0 0.0
    %550 = vmatpush1.msra.mxu0 0.0
    %551 = vmatprep.subr.mxu0 0.0
    %552 = vmatpush1.msra.mxu0 0.0
    %553 = vmatprep.subr.mxu0 0.0
    %554 = vmatpush1.msra.mxu0 0.0
    %555 = vmatprep.subr.mxu0 0.0
    %556 = vmatpush1.msra.mxu0 0.0
    %557 = vmatprep.subr.mxu0 0.0
    %558 = vmatpush1.msra.mxu0 0.0
    %559 = vmatprep.subr.mxu0 0.0
    %560 = vmatpush1.msra.mxu0 0.0
    %561 = vmatprep.subr.mxu0 0.0
    %562 = vmatpush1.msra.mxu0 0.0
    %563 = vmatprep.subr.mxu0 0.0
    %564 = vmatpush1.msra.mxu0 0.0
    %565 = vmatprep.mubr.f32.mxu0 0.0
    %566 = vmatmul.mubr.f32.gmra.mrb[0].mxu0 %v499
    %v567 = vpop.f32.mrb[0].mxu0
    %v568 = vadd.f32 %v496, %v567
    %v569 = vpop.f32.mrb[0].mxu0
    %570 = vdwg.mxu0
    %vm571 = vcmp.ge.f32.partialorder %v568, 0.0
    %v572 = vmul.f32 %v568, 0.01
    %v573 = vsel %vm571, %v568, %v572
    %s574 = scalar_lea.vmem [#allocation3], 128
    %v575 = vld [vmem:[%s574] sm:$0xff]
    %v576 = vld [vmem:[%s574 + $0x8] sm:$0xff]
    %v577 = vld [vmem:[%s574 + $0x10] sm:$0xff]
    %v578 = vld [vmem:[%s574 + $0x18] sm:$0xff]
    %v579 = vld [vmem:[%s574 + $0x20] sm:$0xff]
    %v580 = vld [vmem:[%s574 + $0x28] sm:$0xff]
    %v581 = vld [vmem:[%s574 + $0x30] sm:$0xff]
    %v582 = vld [vmem:[%s574 + $0x38] sm:$0xff]
    %s583 = scalar_lea.vmem %s8, 2
    %v584 = vld [vmem:[%s583] sm:$0x1]
    %v586 = vlaneseq
    %v587 = vshrl.u32 %v586, 7
    %v588 = vsub.s32 0, %v587
    %v589 = vrot.slane %v584, %v588
    %v592 = vsel %vm217, %v573, 0
    %594 = vmatprep.subr.mxu0 0.0
    %595 = vmatpush1.msra.mxu0 %v575
    %596 = vmatprep.subr.mxu0 0.0
    %597 = vmatpush1.msra.mxu0 %v576
    %598 = vmatprep.subr.mxu0 0.0
    %599 = vmatpush1.msra.mxu0 %v577
    %600 = vmatprep.subr.mxu0 0.0
    %601 = vmatpush1.msra.mxu0 %v578
    %602 = vmatprep.subr.mxu0 0.0
    %603 = vmatpush1.msra.mxu0 %v579
    %604 = vmatprep.subr.mxu0 0.0
    %605 = vmatpush1.msra.mxu0 %v580
    %606 = vmatprep.subr.mxu0 0.0
    %607 = vmatpush1.msra.mxu0 %v581
    %608 = vmatprep.subr.mxu0 0.0
    %609 = vmatpush1.msra.mxu0 %v582
    %610 = vmatprep.subr.mxu0 0.0
    %611 = vmatpush1.msra.mxu0 0.0
    %612 = vmatprep.subr.mxu0 0.0
    %613 = vmatpush1.msra.mxu0 0.0
    %614 = vmatprep.subr.mxu0 0.0
    %615 = vmatpush1.msra.mxu0 0.0
    %616 = vmatprep.subr.mxu0 0.0
    %617 = vmatpush1.msra.mxu0 0.0
    %618 = vmatprep.subr.mxu0 0.0
    %619 = vmatpush1.msra.mxu0 0.0
    %620 = vmatprep.subr.mxu0 0.0
    %621 = vmatpush1.msra.mxu0 0.0
    %622 = vmatprep.subr.mxu0 0.0
    %623 = vmatpush1.msra.mxu0 0.0
    %624 = vmatprep.subr.mxu0 0.0
    %625 = vmatpush1.msra.mxu0 0.0
    %626 = vmatprep.subr.mxu0 0.0
    %627 = vmatpush1.msra.mxu0 0.0
    %628 = vmatprep.subr.mxu0 0.0
    %629 = vmatpush1.msra.mxu0 0.0
    %630 = vmatprep.subr.mxu0 0.0
    %631 = vmatpush1.msra.mxu0 0.0
    %632 = vmatprep.subr.mxu0 0.0
    %633 = vmatpush1.msra.mxu0 0.0
    %634 = vmatprep.subr.mxu0 0.0
    %635 = vmatpush1.msra.mxu0 0.0
    %636 = vmatprep.subr.mxu0 0.0
    %637 = vmatpush1.msra.mxu0 0.0
    %638 = vmatprep.subr.mxu0 0.0
    %639 = vmatpush1.msra.mxu0 0.0
    %640 = vmatprep.subr.mxu0 0.0
    %641 = vmatpush1.msra.mxu0 0.0
    %642 = vmatprep.subr.mxu0 0.0
    %643 = vmatpush1.msra.mxu0 0.0
    %644 = vmatprep.subr.mxu0 0.0
    %645 = vmatpush1.msra.mxu0 0.0
    %646 = vmatprep.subr.mxu0 0.0
    %647 = vmatpush1.msra.mxu0 0.0
    %648 = vmatprep.subr.mxu0 0.0
    %649 = vmatpush1.msra.mxu0 0.0
    %650 = vmatprep.subr.mxu0 0.0
    %651 = vmatpush1.msra.mxu0 0.0
    %652 = vmatprep.subr.mxu0 0.0
    %653 = vmatpush1.msra.mxu0 0.0
    %654 = vmatprep.subr.mxu0 0.0
    %655 = vmatpush1.msra.mxu0 0.0
    %656 = vmatprep.subr.mxu0 0.0
    %657 = vmatpush1.msra.mxu0 0.0
    %658 = vmatprep.mubr.f32.mxu0 0.0
    %659 = vmatmul.mubr.f32.gmra.mrb[0].mxu0 %v592
    %v660 = vpop.f32.mrb[0].mxu0
    %v661 = vadd.f32 %v589, %v660
    %v662 = vpop.f32.mrb[0].mxu0
    %663 = vdwg.mxu0
    %vm664 = vcmp.ge.f32.partialorder %v661, 0.0
    %v665 = vmul.f32 %v661, 0.01
    %v666 = vsel %vm664, %v661, %v665
    %s667 = scalar_lea.vmem [#allocation3], 192
    %v668 = vld [vmem:[%s667] sm:$0xff]
    %v669 = vld [vmem:[%s667 + $0x8] sm:$0xff]
    %v670 = vld [vmem:[%s667 + $0x10] sm:$0xff]
    %v671 = vld [vmem:[%s667 + $0x18] sm:$0xff]
    %v672 = vld [vmem:[%s667 + $0x20] sm:$0xff]
    %v673 = vld [vmem:[%s667 + $0x28] sm:$0xff]
    %v674 = vld [vmem:[%s667 + $0x30] sm:$0xff]
    %v675 = vld [vmem:[%s667 + $0x38] sm:$0xff]
    %s676 = scalar_lea.vmem %s8, 3
    %v677 = vld [vmem:[%s676] sm:$0x1]
    %v679 = vlaneseq
    %v680 = vshrl.u32 %v679, 7
    %v681 = vsub.s32 0, %v680
    %v682 = vrot.slane %v677, %v681
    %v685 = vsel %vm217, %v666, 0
    %687 = vmatprep.subr.mxu0 0.0
    %688 = vmatpush1.msra.mxu0 %v668
    %689 = vmatprep.subr.mxu0 0.0
    %690 = vmatpush1.msra.mxu0 %v669
    %691 = vmatprep.subr.mxu0 0.0
    %692 = vmatpush1.msra.mxu0 %v670
    %693 = vmatprep.subr.mxu0 0.0
    %694 = vmatpush1.msra.mxu0 %v671
    %695 = vmatprep.subr.mxu0 0.0
    %696 = vmatpush1.msra.mxu0 %v672
    %697 = vmatprep.subr.mxu0 0.0
    %698 = vmatpush1.msra.mxu0 %v673
    %699 = vmatprep.subr.mxu0 0.0
    %700 = vmatpush1.msra.mxu0 %v674
    %701 = vmatprep.subr.mxu0 0.0
    %702 = vmatpush1.msra.mxu0 %v675
    %703 = vmatprep.subr.mxu0 0.0
    %704 = vmatpush1.msra.mxu0 0.0
    %705 = vmatprep.subr.mxu0 0.0
    %706 = vmatpush1.msra.mxu0 0.0
    %707 = vmatprep.subr.mxu0 0.0
    %708 = vmatpush1.msra.mxu0 0.0
    %709 = vmatprep.subr.mxu0 0.0
    %710 = vmatpush1.msra.mxu0 0.0
    %711 = vmatprep.subr.mxu0 0.0
    %712 = vmatpush1.msra.mxu0 0.0
    %713 = vmatprep.subr.mxu0 0.0
    %714 = vmatpush1.msra.mxu0 0.0
    %715 = vmatprep.subr.mxu0 0.0
    %716 = vmatpush1.msra.mxu0 0.0
    %717 = vmatprep.subr.mxu0 0.0
    %718 = vmatpush1.msra.mxu0 0.0
    %719 = vmatprep.subr.mxu0 0.0
    %720 = vmatpush1.msra.mxu0 0.0
    %721 = vmatprep.subr.mxu0 0.0
    %722 = vmatpush1.msra.mxu0 0.0
    %723 = vmatprep.subr.mxu0 0.0
    %724 = vmatpush1.msra.mxu0 0.0
    %725 = vmatprep.subr.mxu0 0.0
    %726 = vmatpush1.msra.mxu0 0.0
    %727 = vmatprep.subr.mxu0 0.0
    %728 = vmatpush1.msra.mxu0 0.0
    %729 = vmatprep.subr.mxu0 0.0
    %730 = vmatpush1.msra.mxu0 0.0
    %731 = vmatprep.subr.mxu0 0.0
    %732 = vmatpush1.msra.mxu0 0.0
    %733 = vmatprep.subr.mxu0 0.0
    %734 = vmatpush1.msra.mxu0 0.0
    %735 = vmatprep.subr.mxu0 0.0
    %736 = vmatpush1.msra.mxu0 0.0
    %737 = vmatprep.subr.mxu0 0.0
    %738 = vmatpush1.msra.mxu0 0.0
    %739 = vmatprep.subr.mxu0 0.0
    %740 = vmatpush1.msra.mxu0 0.0
    %741 = vmatprep.subr.mxu0 0.0
    %742 = vmatpush1.msra.mxu0 0.0
    %743 = vmatprep.subr.mxu0 0.0
    %744 = vmatpush1.msra.mxu0 0.0
    %745 = vmatprep.subr.mxu0 0.0
    %746 = vmatpush1.msra.mxu0 0.0
    %747 = vmatprep.subr.mxu0 0.0
    %748 = vmatpush1.msra.mxu0 0.0
    %749 = vmatprep.subr.mxu0 0.0
    %750 = vmatpush1.msra.mxu0 0.0
    %751 = vmatprep.mubr.f32.mxu0 0.0
    %752 = vmatmul.mubr.f32.gmra.mrb[0].mxu0 %v685
    %v753 = vpop.f32.mrb[0].mxu0
    %v754 = vadd.f32 %v682, %v753
    %v755 = vpop.f32.mrb[0].mxu0
    %756 = vdwg.mxu0
    %vm757 = vcmp.ge.f32.partialorder %v754, 0.0
    %v758 = vmul.f32 %v754, 0.01
    %v759 = vsel %vm757, %v754, %v758
    %s760 = scalar_lea.vmem %s9, 64
    %v761 = vld [vmem:[%s760] sm:$0xff]
    %v762 = vld [vmem:[%s760 + $0x8] sm:$0xff]
    %v763 = vld [vmem:[%s760 + $0x10] sm:$0xff]
    %v764 = vld [vmem:[%s760 + $0x18] sm:$0xff]
    %v765 = vld [vmem:[%s760 + $0x20] sm:$0xff]
    %v766 = vld [vmem:[%s760 + $0x28] sm:$0xff]
    %v767 = vld [vmem:[%s760 + $0x30] sm:$0xff]
    %v768 = vld [vmem:[%s760 + $0x38] sm:$0xff]
    %s769 = scalar_lea.vmem %s10, 1
    %v770 = vld [vmem:[%s769] sm:$0x1]
    %v772 = vlaneseq
    %v773 = vshrl.u32 %v772, 7
    %v774 = vsub.s32 0, %v773
    %v775 = vrot.slane %v770, %v774
    %v778 = vsel %vm217, %v759, 0
    %780 = vmatprep.subr.mxu0 0.0
    %781 = vmatpush1.msra.mxu0 %v761
    %782 = vmatprep.subr.mxu0 0.0
    %783 = vmatpush1.msra.mxu0 %v762
    %784 = vmatprep.subr.mxu0 0.0
    %785 = vmatpush1.msra.mxu0 %v763
    %786 = vmatprep.subr.mxu0 0.0
    %787 = vmatpush1.msra.mxu0 %v764
    %788 = vmatprep.subr.mxu0 0.0
    %789 = vmatpush1.msra.mxu0 %v765
    %790 = vmatprep.subr.mxu0 0.0
    %791 = vmatpush1.msra.mxu0 %v766
    %792 = vmatprep.subr.mxu0 0.0
    %793 = vmatpush1.msra.mxu0 %v767
    %794 = vmatprep.subr.mxu0 0.0
    %795 = vmatpush1.msra.mxu0 %v768
    %796 = vmatprep.subr.mxu0 0.0
    %797 = vmatpush1.msra.mxu0 0.0
    %798 = vmatprep.subr.mxu0 0.0
    %799 = vmatpush1.msra.mxu0 0.0
    %800 = vmatprep.subr.mxu0 0.0
    %801 = vmatpush1.msra.mxu0 0.0
    %802 = vmatprep.subr.mxu0 0.0
    %803 = vmatpush1.msra.mxu0 0.0
    %804 = vmatprep.subr.mxu0 0.0
    %805 = vmatpush1.msra.mxu0 0.0
    %806 = vmatprep.subr.mxu0 0.0
    %807 = vmatpush1.msra.mxu0 0.0
    %808 = vmatprep.subr.mxu0 0.0
    %809 = vmatpush1.msra.mxu0 0.0
    %810 = vmatprep.subr.mxu0 0.0
    %811 = vmatpush1.msra.mxu0 0.0
    %812 = vmatprep.subr.mxu0 0.0
    %813 = vmatpush1.msra.mxu0 0.0
    %814 = vmatprep.subr.mxu0 0.0
    %815 = vmatpush1.msra.mxu0 0.0
    %816 = vmatprep.subr.mxu0 0.0
    %817 = vmatpush1.msra.mxu0 0.0
    %818 = vmatprep.subr.mxu0 0.0
    %819 = vmatpush1.msra.mxu0 0.0
    %820 = vmatprep.subr.mxu0 0.0
    %821 = vmatpush1.msra.mxu0 0.0
    %822 = vmatprep.subr.mxu0 0.0
    %823 = vmatpush1.msra.mxu0 0.0
    %824 = vmatprep.subr.mxu0 0.0
    %825 = vmatpush1.msra.mxu0 0.0
    %826 = vmatprep.subr.mxu0 0.0
    %827 = vmatpush1.msra.mxu0 0.0
    %828 = vmatprep.subr.mxu0 0.0
    %829 = vmatpush1.msra.mxu0 0.0
    %830 = vmatprep.subr.mxu0 0.0
    %831 = vmatpush1.msra.mxu0 0.0
    %832 = vmatprep.subr.mxu0 0.0
    %833 = vmatpush1.msra.mxu0 0.0
    %834 = vmatprep.subr.mxu0 0.0
    %835 = vmatpush1.msra.mxu0 0.0
    %836 = vmatprep.subr.mxu0 0.0
    %837 = vmatpush1.msra.mxu0 0.0
    %838 = vmatprep.subr.mxu0 0.0
    %839 = vmatpush1.msra.mxu0 0.0
    %840 = vmatprep.subr.mxu0 0.0
    %841 = vmatpush1.msra.mxu0 0.0
    %842 = vmatprep.subr.mxu0 0.0
    %843 = vmatpush1.msra.mxu0 0.0
    %844 = vmatprep.mubr.f32.mxu0 0.0
    %845 = vmatmul.mubr.f32.gmra.mrb[0].mxu0 %v778
    %v846 = vpop.f32.mrb[0].mxu0
    %v847 = vadd.f32 %v775, %v846
    %v848 = vpop.f32.mrb[0].mxu0
    %849 = vdwg.mxu0
    %v850 = vtanh.pop %v847
    %v851 = vmul.f32 %v850, 1.442695
    %v852 = vpow.pop %v851
    %v853 = vmul.f32 %v113, %v852
    %855 = vrot.lane.b32.xlu0 %v847, 120
    %v856 = vpop.permute.xlu0 %855
    %v858 = vadd.f32 %v853, %v856
    %v859 = vsel %vm125, %v850, 0.0
    %860 = vadd.xlane.f32.xlu0 %v859
    %v861 = vpop.xlane.xlu0 %860
    %v862 = vadd.f32 %v487, %v861
    %v863 = vld [vmem:[%s11] sm:$0xff]
    %v864 = vld [vmem:[%s13] sm:$0xff]
    %v866 = vsel %vm125, %v858, 0
    %868 = vmatprep.subr.mxu0 0.0
    %869 = vmatpush1.msra.mxu0 %v864
    %870 = vmatprep.subr.mxu0 0.0
    %871 = vmatpush1.msra.mxu0 0.0
    %872 = vmatprep.subr.mxu0 0.0
    %873 = vmatpush1.msra.mxu0 0.0
    %874 = vmatprep.subr.mxu0 0.0
    %875 = vmatpush1.msra.mxu0 0.0
    %876 = vmatprep.subr.mxu0 0.0
    %877 = vmatpush1.msra.mxu0 0.0
    %878 = vmatprep.subr.mxu0 0.0
    %879 = vmatpush1.msra.mxu0 0.0
    %880 = vmatprep.subr.mxu0 0.0
    %881 = vmatpush1.msra.mxu0 0.0
    %882 = vmatprep.subr.mxu0 0.0
    %883 = vmatpush1.msra.mxu0 0.0
    %884 = vmatprep.subr.mxu0 0.0
    %885 = vmatpush1.msra.mxu0 0.0
    %886 = vmatprep.subr.mxu0 0.0
    %887 = vmatpush1.msra.mxu0 0.0
    %888 = vmatprep.subr.mxu0 0.0
    %889 = vmatpush1.msra.mxu0 0.0
    %890 = vmatprep.subr.mxu0 0.0
    %891 = vmatpush1.msra.mxu0 0.0
    %892 = vmatprep.subr.mxu0 0.0
    %893 = vmatpush1.msra.mxu0 0.0
    %894 = vmatprep.subr.mxu0 0.0
    %895 = vmatpush1.msra.mxu0 0.0
    %896 = vmatprep.subr.mxu0 0.0
    %897 = vmatpush1.msra.mxu0 0.0
    %898 = vmatprep.subr.mxu0 0.0
    %899 = vmatpush1.msra.mxu0 0.0
    %900 = vmatprep.subr.mxu0 0.0
    %901 = vmatpush1.msra.mxu0 0.0
    %902 = vmatprep.subr.mxu0 0.0
    %903 = vmatpush1.msra.mxu0 0.0
    %904 = vmatprep.subr.mxu0 0.0
    %905 = vmatpush1.msra.mxu0 0.0
    %906 = vmatprep.subr.mxu0 0.0
    %907 = vmatpush1.msra.mxu0 0.0
    %908 = vmatprep.subr.mxu0 0.0
    %909 = vmatpush1.msra.mxu0 0.0
    %910 = vmatprep.subr.mxu0 0.0
    %911 = vmatpush1.msra.mxu0 0.0
    %912 = vmatprep.subr.mxu0 0.0
    %913 = vmatpush1.msra.mxu0 0.0
    %914 = vmatprep.subr.mxu0 0.0
    %915 = vmatpush1.msra.mxu0 0.0
    %916 = vmatprep.subr.mxu0 0.0
    %917 = vmatpush1.msra.mxu0 0.0
    %918 = vmatprep.subr.mxu0 0.0
    %919 = vmatpush1.msra.mxu0 0.0
    %920 = vmatprep.subr.mxu0 0.0
    %921 = vmatpush1.msra.mxu0 0.0
    %922 = vmatprep.subr.mxu0 0.0
    %923 = vmatpush1.msra.mxu0 0.0
    %924 = vmatprep.subr.mxu0 0.0
    %925 = vmatpush1.msra.mxu0 0.0
    %926 = vmatprep.subr.mxu0 0.0
    %927 = vmatpush1.msra.mxu0 0.0
    %928 = vmatprep.subr.mxu0 0.0
    %929 = vmatpush1.msra.mxu0 0.0
    %930 = vmatprep.subr.mxu0 0.0
    %931 = vmatpush1.msra.mxu0 0.0
    %932 = vmatprep.mubr.f32.mxu0 0.0
    %933 = vmatmul.mubr.f32.gmra.mrb[0].mxu0 %v866
    %v934 = vpop.f32.mrb[0].mxu0
    %v935 = vadd.f32 0.0, %v934
    %v936 = vpop.f32.mrb[0].mxu0
    %937 = vdwg.mxu0
    %938 = vmatprep.subr.mxu0 0.0
    %939 = vmatpush1.msra.mxu0 %v863
    %940 = vmatprep.subr.mxu0 0.0
    %941 = vmatpush1.msra.mxu0 0.0
    %942 = vmatprep.subr.mxu0 0.0
    %943 = vmatpush1.msra.mxu0 0.0
    %944 = vmatprep.subr.mxu0 0.0
    %945 = vmatpush1.msra.mxu0 0.0
    %946 = vmatprep.subr.mxu0 0.0
    %947 = vmatpush1.msra.mxu0 0.0
    %948 = vmatprep.subr.mxu0 0.0
    %949 = vmatpush1.msra.mxu0 0.0
    %950 = vmatprep.subr.mxu0 0.0
    %951 = vmatpush1.msra.mxu0 0.0
    %952 = vmatprep.subr.mxu0 0.0
    %953 = vmatpush1.msra.mxu0 0.0
    %954 = vmatprep.subr.mxu0 0.0
    %955 = vmatpush1.msra.mxu0 0.0
    %956 = vmatprep.subr.mxu0 0.0
    %957 = vmatpush1.msra.mxu0 0.0
    %958 = vmatprep.subr.mxu0 0.0
    %959 = vmatpush1.msra.mxu0 0.0
    %960 = vmatprep.subr.mxu0 0.0
    %961 = vmatpush1.msra.mxu0 0.0
    %962 = vmatprep.subr.mxu0 0.0
    %963 = vmatpush1.msra.mxu0 0.0
    %964 = vmatprep.subr.mxu0 0.0
    %965 = vmatpush1.msra.mxu0 0.0
    %966 = vmatprep.subr.mxu0 0.0
    %967 = vmatpush1.msra.mxu0 0.0
    %968 = vmatprep.subr.mxu0 0.0
    %969 = vmatpush1.msra.mxu0 0.0
    %970 = vmatprep.subr.mxu0 0.0
    %971 = vmatpush1.msra.mxu0 0.0
    %972 = vmatprep.subr.mxu0 0.0
    %973 = vmatpush1.msra.mxu0 0.0
    %974 = vmatprep.subr.mxu0 0.0
    %975 = vmatpush1.msra.mxu0 0.0
    %976 = vmatprep.subr.mxu0 0.0
    %977 = vmatpush1.msra.mxu0 0.0
    %978 = vmatprep.subr.mxu0 0.0
    %979 = vmatpush1.msra.mxu0 0.0
    %980 = vmatprep.subr.mxu0 0.0
    %981 = vmatpush1.msra.mxu0 0.0
    %982 = vmatprep.subr.mxu0 0.0
    %983 = vmatpush1.msra.mxu0 0.0
    %984 = vmatprep.subr.mxu0 0.0
    %985 = vmatpush1.msra.mxu0 0.0
    %986 = vmatprep.subr.mxu0 0.0
    %987 = vmatpush1.msra.mxu0 0.0
    %988 = vmatprep.subr.mxu0 0.0
    %989 = vmatpush1.msra.mxu0 0.0
    %990 = vmatprep.subr.mxu0 0.0
    %991 = vmatpush1.msra.mxu0 0.0
    %992 = vmatprep.subr.mxu0 0.0
    %993 = vmatpush1.msra.mxu0 0.0
    %994 = vmatprep.subr.mxu0 0.0
    %995 = vmatpush1.msra.mxu0 0.0
    %996 = vmatprep.subr.mxu0 0.0
    %997 = vmatpush1.msra.mxu0 0.0
    %998 = vmatprep.subr.mxu0 0.0
    %999 = vmatpush1.msra.mxu0 0.0
    %1000 = vmatprep.subr.mxu0 0.0
    %1001 = vmatpush1.msra.mxu0 0.0
    %1002 = vmatprep.mubr.f32.mxu0 0.0
    %1003 = vmatmul.mubr.f32.gmra.mrb[0].mxu0 %v499
    %v1004 = vpop.f32.mrb[0].mxu0
    %v1005 = vadd.f32 %v935, %v1004
    %v1006 = vpop.f32.mrb[0].mxu0
    %1007 = vdwg.mxu0
    %v1008 = vld [vmem:[%s12] sm:$0xff]
    %v1009 = vld [vmem:[%s14] sm:$0xff]
    %1010 = vmatprep.subr.mxu0 0.0
    %1011 = vmatpush1.msra.mxu0 %v1009
    %1012 = vmatprep.subr.mxu0 0.0
    %1013 = vmatpush1.msra.mxu0 0.0
    %1014 = vmatprep.subr.mxu0 0.0
    %1015 = vmatpush1.msra.mxu0 0.0
    %1016 = vmatprep.subr.mxu0 0.0
    %1017 = vmatpush1.msra.mxu0 0.0
    %1018 = vmatprep.subr.mxu0 0.0
    %1019 = vmatpush1.msra.mxu0 0.0
    %1020 = vmatprep.subr.mxu0 0.0
    %1021 = vmatpush1.msra.mxu0 0.0
    %1022 = vmatprep.subr.mxu0 0.0
    %1023 = vmatpush1.msra.mxu0 0.0
    %1024 = vmatprep.subr.mxu0 0.0
    %1025 = vmatpush1.msra.mxu0 0.0
    %1026 = vmatprep.subr.mxu0 0.0
    %1027 = vmatpush1.msra.mxu0 0.0
    %1028 = vmatprep.subr.mxu0 0.0
    %1029 = vmatpush1.msra.mxu0 0.0
    %1030 = vmatprep.subr.mxu0 0.0
    %1031 = vmatpush1.msra.mxu0 0.0
    %1032 = vmatprep.subr.mxu0 0.0
    %1033 = vmatpush1.msra.mxu0 0.0
    %1034 = vmatprep.subr.mxu0 0.0
    %1035 = vmatpush1.msra.mxu0 0.0
    %1036 = vmatprep.subr.mxu0 0.0
    %1037 = vmatpush1.msra.mxu0 0.0
    %1038 = vmatprep.subr.mxu0 0.0
    %1039 = vmatpush1.msra.mxu0 0.0
    %1040 = vmatprep.subr.mxu0 0.0
    %1041 = vmatpush1.msra.mxu0 0.0
    %1042 = vmatprep.subr.mxu0 0.0
    %1043 = vmatpush1.msra.mxu0 0.0
    %1044 = vmatprep.subr.mxu0 0.0
    %1045 = vmatpush1.msra.mxu0 0.0
    %1046 = vmatprep.subr.mxu0 0.0
    %1047 = vmatpush1.msra.mxu0 0.0
    %1048 = vmatprep.subr.mxu0 0.0
    %1049 = vmatpush1.msra.mxu0 0.0
    %1050 = vmatprep.subr.mxu0 0.0
    %1051 = vmatpush1.msra.mxu0 0.0
    %1052 = vmatprep.subr.mxu0 0.0
    %1053 = vmatpush1.msra.mxu0 0.0
    %1054 = vmatprep.subr.mxu0 0.0
    %1055 = vmatpush1.msra.mxu0 0.0
    %1056 = vmatprep.subr.mxu0 0.0
    %1057 = vmatpush1.msra.mxu0 0.0
    %1058 = vmatprep.subr.mxu0 0.0
    %1059 = vmatpush1.msra.mxu0 0.0
    %1060 = vmatprep.subr.mxu0 0.0
    %1061 = vmatpush1.msra.mxu0 0.0
    %1062 = vmatprep.subr.mxu0 0.0
    %1063 = vmatpush1.msra.mxu0 0.0
    %1064 = vmatprep.subr.mxu0 0.0
    %1065 = vmatpush1.msra.mxu0 0.0
    %1066 = vmatprep.subr.mxu0 0.0
    %1067 = vmatpush1.msra.mxu0 0.0
    %1068 = vmatprep.subr.mxu0 0.0
    %1069 = vmatpush1.msra.mxu0 0.0
    %1070 = vmatprep.subr.mxu0 0.0
    %1071 = vmatpush1.msra.mxu0 0.0
    %1072 = vmatprep.subr.mxu0 0.0
    %1073 = vmatpush1.msra.mxu0 0.0
    %1074 = vmatprep.mubr.f32.mxu0 0.0
    %1075 = vmatmul.mubr.f32.gmra.mrb[0].mxu0 %v866
    %v1076 = vpop.f32.mrb[0].mxu0
    %v1077 = vadd.f32 0.0, %v1076
    %v1078 = vpop.f32.mrb[0].mxu0
    %1079 = vdwg.mxu0
    %1080 = vmatprep.subr.mxu0 0.0
    %1081 = vmatpush1.msra.mxu0 %v1008
    %1082 = vmatprep.subr.mxu0 0.0
    %1083 = vmatpush1.msra.mxu0 0.0
    %1084 = vmatprep.subr.mxu0 0.0
    %1085 = vmatpush1.msra.mxu0 0.0
    %1086 = vmatprep.subr.mxu0 0.0
    %1087 = vmatpush1.msra.mxu0 0.0
    %1088 = vmatprep.subr.mxu0 0.0
    %1089 = vmatpush1.msra.mxu0 0.0
    %1090 = vmatprep.subr.mxu0 0.0
    %1091 = vmatpush1.msra.mxu0 0.0
    %1092 = vmatprep.subr.mxu0 0.0
    %1093 = vmatpush1.msra.mxu0 0.0
    %1094 = vmatprep.subr.mxu0 0.0
    %1095 = vmatpush1.msra.mxu0 0.0
    %1096 = vmatprep.subr.mxu0 0.0
    %1097 = vmatpush1.msra.mxu0 0.0
    %1098 = vmatprep.subr.mxu0 0.0
    %1099 = vmatpush1.msra.mxu0 0.0
    %1100 = vmatprep.subr.mxu0 0.0
    %1101 = vmatpush1.msra.mxu0 0.0
    %1102 = vmatprep.subr.mxu0 0.0
    %1103 = vmatpush1.msra.mxu0 0.0
    %1104 = vmatprep.subr.mxu0 0.0
    %1105 = vmatpush1.msra.mxu0 0.0
    %1106 = vmatprep.subr.mxu0 0.0
    %1107 = vmatpush1.msra.mxu0 0.0
    %1108 = vmatprep.subr.mxu0 0.0
    %1109 = vmatpush1.msra.mxu0 0.0
    %1110 = vmatprep.subr.mxu0 0.0
    %1111 = vmatpush1.msra.mxu0 0.0
    %1112 = vmatprep.subr.mxu0 0.0
    %1113 = vmatpush1.msra.mxu0 0.0
    %1114 = vmatprep.subr.mxu0 0.0
    %1115 = vmatpush1.msra.mxu0 0.0
    %1116 = vmatprep.subr.mxu0 0.0
    %1117 = vmatpush1.msra.mxu0 0.0
    %1118 = vmatprep.subr.mxu0 0.0
    %1119 = vmatpush1.msra.mxu0 0.0
    %1120 = vmatprep.subr.mxu0 0.0
    %1121 = vmatpush1.msra.mxu0 0.0
    %1122 = vmatprep.subr.mxu0 0.0
    %1123 = vmatpush1.msra.mxu0 0.0
    %1124 = vmatprep.subr.mxu0 0.0
    %1125 = vmatpush1.msra.mxu0 0.0
    %1126 = vmatprep.subr.mxu0 0.0
    %1127 = vmatpush1.msra.mxu0 0.0
    %1128 = vmatprep.subr.mxu0 0.0
    %1129 = vmatpush1.msra.mxu0 0.0
    %1130 = vmatprep.subr.mxu0 0.0
    %1131 = vmatpush1.msra.mxu0 0.0
    %1132 = vmatprep.subr.mxu0 0.0
    %1133 = vmatpush1.msra.mxu0 0.0
    %1134 = vmatprep.subr.mxu0 0.0
    %1135 = vmatpush1.msra.mxu0 0.0
    %1136 = vmatprep.subr.mxu0 0.0
    %1137 = vmatpush1.msra.mxu0 0.0
    %1138 = vmatprep.subr.mxu0 0.0
    %1139 = vmatpush1.msra.mxu0 0.0
    %1140 = vmatprep.subr.mxu0 0.0
    %1141 = vmatpush1.msra.mxu0 0.0
    %1142 = vmatprep.subr.mxu0 0.0
    %1143 = vmatpush1.msra.mxu0 0.0
    %1144 = vmatprep.mubr.f32.mxu0 0.0
    %1145 = vmatmul.mubr.f32.gmra.mrb[0].mxu0 %v499
    %v1146 = vpop.f32.mrb[0].mxu0
    %v1147 = vadd.f32 %v1077, %v1146
    %v1148 = vpop.f32.mrb[0].mxu0
    %1149 = vdwg.mxu0
    %s1150 = scalar_lea.vmem %s3, 1
    %v1151 = vld [vmem:[%s1150] sm:$0x1]
    %s1152 = scalar_lea.vmem %s1, 1
    %v1153 = vld [vmem:[%s1152] sm:$0x1]
    %v1155 = vlaneseq
    %v1156 = vshrl.u32 %v1155, 7
    %v1157 = vsub.s32 0, %v1156
    %v1158 = vrot.slane %v1153, %v1157
    %v1160 = vadd.f32 %v1005, %v1158
    %v1162 = vlaneseq
    %v1163 = vshrl.u32 %v1162, 7
    %v1164 = vsub.s32 0, %v1163
    %v1165 = vrot.slane %v1151, %v1164
    %v1167 = vmul.f32 %v1165, %v1160
    %s1168 = scalar_lea.vmem %s4, 1
    %v1169 = vld [vmem:[%s1168] sm:$0x1]
    %s1170 = scalar_lea.vmem %s2, 1
    %v1171 = vld [vmem:[%s1170] sm:$0x1]
    %v1173 = vlaneseq
    %v1174 = vshrl.u32 %v1173, 7
    %v1175 = vsub.s32 0, %v1174
    %v1176 = vrot.slane %v1171, %v1175
    %v1178 = vadd.f32 %v1147, %v1176
    %v1180 = vlaneseq
    %v1181 = vshrl.u32 %v1180, 7
    %v1182 = vsub.s32 0, %v1181
    %v1183 = vrot.slane %v1169, %v1182
    %v1185 = vmul.f32 %v1183, %v1178
    %vm1186 = vcmp.ge.f32.partialorder %v1167, 0.0
    %v1187 = vmul.f32 %v1167, 0.9
    %v1188 = vsel %vm1186, %v1167, %v1187
    %vm1189 = vcmp.ge.f32.partialorder %v1185, 0.0
    %v1190 = vmul.f32 %v1185, 0.9
    %v1191 = vsel %vm1189, %v1185, %v1190
    %s1192 = scalar_lea.vmem %s5, 16
    %v1193 = vld [vmem:[%s1192] sm:$0xff]
    %s1194 = scalar_lea.vmem %s6, 2
    %v1195 = vld [vmem:[%s1194] sm:$0x1]
    %v1197 = vlaneseq
    %v1198 = vshrl.u32 %v1197, 7
    %v1199 = vsub.s32 0, %v1198
    %v1200 = vrot.slane %v1195, %v1199
    %v1203 = vsel %vm125, %v1188, 0
    %1205 = vmatprep.subr.mxu0 0.0
    %1206 = vmatpush1.msra.mxu0 %v1193
    %1207 = vmatprep.subr.mxu0 0.0
    %1208 = vmatpush1.msra.mxu0 0.0
    %1209 = vmatprep.subr.mxu0 0.0
    %1210 = vmatpush1.msra.mxu0 0.0
    %1211 = vmatprep.subr.mxu0 0.0
    %1212 = vmatpush1.msra.mxu0 0.0
    %1213 = vmatprep.subr.mxu0 0.0
    %1214 = vmatpush1.msra.mxu0 0.0
    %1215 = vmatprep.subr.mxu0 0.0
    %1216 = vmatpush1.msra.mxu0 0.0
    %1217 = vmatprep.subr.mxu0 0.0
    %1218 = vmatpush1.msra.mxu0 0.0
    %1219 = vmatprep.subr.mxu0 0.0
    %1220 = vmatpush1.msra.mxu0 0.0
    %1221 = vmatprep.subr.mxu0 0.0
    %1222 = vmatpush1.msra.mxu0 0.0
    %1223 = vmatprep.subr.mxu0 0.0
    %1224 = vmatpush1.msra.mxu0 0.0
    %1225 = vmatprep.subr.mxu0 0.0
    %1226 = vmatpush1.msra.mxu0 0.0
    %1227 = vmatprep.subr.mxu0 0.0
    %1228 = vmatpush1.msra.mxu0 0.0
    %1229 = vmatprep.subr.mxu0 0.0
    %1230 = vmatpush1.msra.mxu0 0.0
    %1231 = vmatprep.subr.mxu0 0.0
    %1232 = vmatpush1.msra.mxu0 0.0
    %1233 = vmatprep.subr.mxu0 0.0
    %1234 = vmatpush1.msra.mxu0 0.0
    %1235 = vmatprep.subr.mxu0 0.0
    %1236 = vmatpush1.msra.mxu0 0.0
    %1237 = vmatprep.subr.mxu0 0.0
    %1238 = vmatpush1.msra.mxu0 0.0
    %1239 = vmatprep.subr.mxu0 0.0
    %1240 = vmatpush1.msra.mxu0 0.0
    %1241 = vmatprep.subr.mxu0 0.0
    %1242 = vmatpush1.msra.mxu0 0.0
    %1243 = vmatprep.subr.mxu0 0.0
    %1244 = vmatpush1.msra.mxu0 0.0
    %1245 = vmatprep.subr.mxu0 0.0
    %1246 = vmatpush1.msra.mxu0 0.0
    %1247 = vmatprep.subr.mxu0 0.0
    %1248 = vmatpush1.msra.mxu0 0.0
    %1249 = vmatprep.subr.mxu0 0.0
    %1250 = vmatpush1.msra.mxu0 0.0
    %1251 = vmatprep.subr.mxu0 0.0
    %1252 = vmatpush1.msra.mxu0 0.0
    %1253 = vmatprep.subr.mxu0 0.0
    %1254 = vmatpush1.msra.mxu0 0.0
    %1255 = vmatprep.subr.mxu0 0.0
    %1256 = vmatpush1.msra.mxu0 0.0
    %1257 = vmatprep.subr.mxu0 0.0
    %1258 = vmatpush1.msra.mxu0 0.0
    %1259 = vmatprep.subr.mxu0 0.0
    %1260 = vmatpush1.msra.mxu0 0.0
    %1261 = vmatprep.subr.mxu0 0.0
    %1262 = vmatpush1.msra.mxu0 0.0
    %1263 = vmatprep.subr.mxu0 0.0
    %1264 = vmatpush1.msra.mxu0 0.0
    %1265 = vmatprep.subr.mxu0 0.0
    %1266 = vmatpush1.msra.mxu0 0.0
    %1267 = vmatprep.subr.mxu0 0.0
    %1268 = vmatpush1.msra.mxu0 0.0
    %1269 = vmatprep.mubr.f32.mxu0 0.0
    %1270 = vmatmul.mubr.f32.gmra.mrb[0].mxu0 %v1203
    %v1271 = vpop.f32.mrb[0].mxu0
    %v1272 = vadd.f32 %v1200, %v1271
    %v1273 = vpop.f32.mrb[0].mxu0
    %1274 = vdwg.mxu0
    %vm1275 = vcmp.ge.f32.partialorder %v1272, 0.0
    %v1276 = vmul.f32 %v1272, 0.01
    %v1277 = vsel %vm1275, %v1272, %v1276
    %s1278 = scalar_lea.vmem [#allocation3], 256
    %v1279 = vld [vmem:[%s1278] sm:$0xff]
    %v1280 = vld [vmem:[%s1278 + $0x8] sm:$0xff]
    %v1281 = vld [vmem:[%s1278 + $0x10] sm:$0xff]
    %v1282 = vld [vmem:[%s1278 + $0x18] sm:$0xff]
    %v1283 = vld [vmem:[%s1278 + $0x20] sm:$0xff]
    %v1284 = vld [vmem:[%s1278 + $0x28] sm:$0xff]
    %v1285 = vld [vmem:[%s1278 + $0x30] sm:$0xff]
    %v1286 = vld [vmem:[%s1278 + $0x38] sm:$0xff]
    %s1287 = scalar_lea.vmem %s8, 4
    %v1288 = vld [vmem:[%s1287] sm:$0x1]
    %v1290 = vlaneseq
    %v1291 = vshrl.u32 %v1290, 7
    %v1292 = vsub.s32 0, %v1291
    %v1293 = vrot.slane %v1288, %v1292
    %v1296 = vsel %vm217, %v1277, 0
    %1298 = vmatprep.subr.mxu0 0.0
    %1299 = vmatpush1.msra.mxu0 %v1279
    %1300 = vmatprep.subr.mxu0 0.0
    %1301 = vmatpush1.msra.mxu0 %v1280
    %1302 = vmatprep.subr.mxu0 0.0
    %1303 = vmatpush1.msra.mxu0 %v1281
    %1304 = vmatprep.subr.mxu0 0.0
    %1305 = vmatpush1.msra.mxu0 %v1282
    %1306 = vmatprep.subr.mxu0 0.0
    %1307 = vmatpush1.msra.mxu0 %v1283
    %1308 = vmatprep.subr.mxu0 0.0
    %1309 = vmatpush1.msra.mxu0 %v1284
    %1310 = vmatprep.subr.mxu0 0.0
    %1311 = vmatpush1.msra.mxu0 %v1285
    %1312 = vmatprep.subr.mxu0 0.0
    %1313 = vmatpush1.msra.mxu0 %v1286
    %1314 = vmatprep.subr.mxu0 0.0
    %1315 = vmatpush1.msra.mxu0 0.0
    %1316 = vmatprep.subr.mxu0 0.0
    %1317 = vmatpush1.msra.mxu0 0.0
    %1318 = vmatprep.subr.mxu0 0.0
    %1319 = vmatpush1.msra.mxu0 0.0
    %1320 = vmatprep.subr.mxu0 0.0
    %1321 = vmatpush1.msra.mxu0 0.0
    %1322 = vmatprep.subr.mxu0 0.0
    %1323 = vmatpush1.msra.mxu0 0.0
    %1324 = vmatprep.subr.mxu0 0.0
    %1325 = vmatpush1.msra.mxu0 0.0
    %1326 = vmatprep.subr.mxu0 0.0
    %1327 = vmatpush1.msra.mxu0 0.0
    %1328 = vmatprep.subr.mxu0 0.0
    %1329 = vmatpush1.msra.mxu0 0.0
    %1330 = vmatprep.subr.mxu0 0.0
    %1331 = vmatpush1.msra.mxu0 0.0
    %1332 = vmatprep.subr.mxu0 0.0
    %1333 = vmatpush1.msra.mxu0 0.0
    %1334 = vmatprep.subr.mxu0 0.0
    %1335 = vmatpush1.msra.mxu0 0.0
    %1336 = vmatprep.subr.mxu0 0.0
    %1337 = vmatpush1.msra.mxu0 0.0
    %1338 = vmatprep.subr.mxu0 0.0
    %1339 = vmatpush1.msra.mxu0 0.0
    %1340 = vmatprep.subr.mxu0 0.0
    %1341 = vmatpush1.msra.mxu0 0.0
    %1342 = vmatprep.subr.mxu0 0.0
    %1343 = vmatpush1.msra.mxu0 0.0
    %1344 = vmatprep.subr.mxu0 0.0
    %1345 = vmatpush1.msra.mxu0 0.0
    %1346 = vmatprep.subr.mxu0 0.0
    %1347 = vmatpush1.msra.mxu0 0.0
    %1348 = vmatprep.subr.mxu0 0.0
    %1349 = vmatpush1.msra.mxu0 0.0
    %1350 = vmatprep.subr.mxu0 0.0
    %1351 = vmatpush1.msra.mxu0 0.0
    %1352 = vmatprep.subr.mxu0 0.0
    %1353 = vmatpush1.msra.mxu0 0.0
    %1354 = vmatprep.subr.mxu0 0.0
    %1355 = vmatpush1.msra.mxu0 0.0
    %1356 = vmatprep.subr.mxu0 0.0
    %1357 = vmatpush1.msra.mxu0 0.0
    %1358 = vmatprep.subr.mxu0 0.0
    %1359 = vmatpush1.msra.mxu0 0.0
    %1360 = vmatprep.subr.mxu0 0.0
    %1361 = vmatpush1.msra.mxu0 0.0
    %1362 = vmatprep.mubr.f32.mxu0 0.0
    %1363 = vmatmul.mubr.f32.gmra.mrb[0].mxu0 %v1296
    %v1364 = vpop.f32.mrb[0].mxu0
    %v1365 = vadd.f32 %v1293, %v1364
    %v1366 = vpop.f32.mrb[0].mxu0
    %1367 = vdwg.mxu0
    %vm1368 = vcmp.ge.f32.partialorder %v1365, 0.0
    %v1369 = vmul.f32 %v1365, 0.01
    %v1370 = vsel %vm1368, %v1365, %v1369
    %s1371 = scalar_lea.vmem [#allocation3], 320
    %v1372 = vld [vmem:[%s1371] sm:$0xff]
    %v1373 = vld [vmem:[%s1371 + $0x8] sm:$0xff]
    %v1374 = vld [vmem:[%s1371 + $0x10] sm:$0xff]
    %v1375 = vld [vmem:[%s1371 + $0x18] sm:$0xff]
    %v1376 = vld [vmem:[%s1371 + $0x20] sm:$0xff]
    %v1377 = vld [vmem:[%s1371 + $0x28] sm:$0xff]
    %v1378 = vld [vmem:[%s1371 + $0x30] sm:$0xff]
    %v1379 = vld [vmem:[%s1371 + $0x38] sm:$0xff]
    %s1380 = scalar_lea.vmem %s8, 5
    %v1381 = vld [vmem:[%s1380] sm:$0x1]
    %v1383 = vlaneseq
    %v1384 = vshrl.u32 %v1383, 7
    %v1385 = vsub.s32 0, %v1384
    %v1386 = vrot.slane %v1381, %v1385
    %v1389 = vsel %vm217, %v1370, 0
    %1391 = vmatprep.subr.mxu0 0.0
    %1392 = vmatpush1.msra.mxu0 %v1372
    %1393 = vmatprep.subr.mxu0 0.0
    %1394 = vmatpush1.msra.mxu0 %v1373
    %1395 = vmatprep.subr.mxu0 0.0
    %1396 = vmatpush1.msra.mxu0 %v1374
    %1397 = vmatprep.subr.mxu0 0.0
    %1398 = vmatpush1.msra.mxu0 %v1375
    %1399 = vmatprep.subr.mxu0 0.0
    %1400 = vmatpush1.msra.mxu0 %v1376
    %1401 = vmatprep.subr.mxu0 0.0
    %1402 = vmatpush1.msra.mxu0 %v1377
    %1403 = vmatprep.subr.mxu0 0.0
    %1404 = vmatpush1.msra.mxu0 %v1378
    %1405 = vmatprep.subr.mxu0 0.0
    %1406 = vmatpush1.msra.mxu0 %v1379
    %1407 = vmatprep.subr.mxu0 0.0
    %1408 = vmatpush1.msra.mxu0 0.0
    %1409 = vmatprep.subr.mxu0 0.0
    %1410 = vmatpush1.msra.mxu0 0.0
    %1411 = vmatprep.subr.mxu0 0.0
    %1412 = vmatpush1.msra.mxu0 0.0
    %1413 = vmatprep.subr.mxu0 0.0
    %1414 = vmatpush1.msra.mxu0 0.0
    %1415 = vmatprep.subr.mxu0 0.0
    %1416 = vmatpush1.msra.mxu0 0.0
    %1417 = vmatprep.subr.mxu0 0.0
    %1418 = vmatpush1.msra.mxu0 0.0
    %1419 = vmatprep.subr.mxu0 0.0
    %1420 = vmatpush1.msra.mxu0 0.0
    %1421 = vmatprep.subr.mxu0 0.0
    %1422 = vmatpush1.msra.mxu0 0.0
    %1423 = vmatprep.subr.mxu0 0.0
    %1424 = vmatpush1.msra.mxu0 0.0
    %1425 = vmatprep.subr.mxu0 0.0
    %1426 = vmatpush1.msra.mxu0 0.0
    %1427 = vmatprep.subr.mxu0 0.0
    %1428 = vmatpush1.msra.mxu0 0.0
    %1429 = vmatprep.subr.mxu0 0.0
    %1430 = vmatpush1.msra.mxu0 0.0
    %1431 = vmatprep.subr.mxu0 0.0
    %1432 = vmatpush1.msra.mxu0 0.0
    %1433 = vmatprep.subr.mxu0 0.0
    %1434 = vmatpush1.msra.mxu0 0.0
    %1435 = vmatprep.subr.mxu0 0.0
    %1436 = vmatpush1.msra.mxu0 0.0
    %1437 = vmatprep.subr.mxu0 0.0
    %1438 = vmatpush1.msra.mxu0 0.0
    %1439 = vmatprep.subr.mxu0 0.0
    %1440 = vmatpush1.msra.mxu0 0.0
    %1441 = vmatprep.subr.mxu0 0.0
    %1442 = vmatpush1.msra.mxu0 0.0
    %1443 = vmatprep.subr.mxu0 0.0
    %1444 = vmatpush1.msra.mxu0 0.0
    %1445 = vmatprep.subr.mxu0 0.0
    %1446 = vmatpush1.msra.mxu0 0.0
    %1447 = vmatprep.subr.mxu0 0.0
    %1448 = vmatpush1.msra.mxu0 0.0
    %1449 = vmatprep.subr.mxu0 0.0
    %1450 = vmatpush1.msra.mxu0 0.0
    %1451 = vmatprep.subr.mxu0 0.0
    %1452 = vmatpush1.msra.mxu0 0.0
    %1453 = vmatprep.subr.mxu0 0.0
    %1454 = vmatpush1.msra.mxu0 0.0
    %1455 = vmatprep.mubr.f32.mxu0 0.0
    %1456 = vmatmul.mubr.f32.gmra.mrb[0].mxu0 %v1389
    %v1457 = vpop.f32.mrb[0].mxu0
    %v1458 = vadd.f32 %v1386, %v1457
    %v1459 = vpop.f32.mrb[0].mxu0
    %1460 = vdwg.mxu0
    %vm1461 = vcmp.ge.f32.partialorder %v1458, 0.0
    %v1462 = vmul.f32 %v1458, 0.01
    %v1463 = vsel %vm1461, %v1458, %v1462
    %s1464 = scalar_lea.vmem %s9, 128
    %v1465 = vld [vmem:[%s1464] sm:$0xff]
    %v1466 = vld [vmem:[%s1464 + $0x8] sm:$0xff]
    %v1467 = vld [vmem:[%s1464 + $0x10] sm:$0xff]
    %v1468 = vld [vmem:[%s1464 + $0x18] sm:$0xff]
    %v1469 = vld [vmem:[%s1464 + $0x20] sm:$0xff]
    %v1470 = vld [vmem:[%s1464 + $0x28] sm:$0xff]
    %v1471 = vld [vmem:[%s1464 + $0x30] sm:$0xff]
    %v1472 = vld [vmem:[%s1464 + $0x38] sm:$0xff]
    %s1473 = scalar_lea.vmem %s10, 2
    %v1474 = vld [vmem:[%s1473] sm:$0x1]
    %v1476 = vlaneseq
    %v1477 = vshrl.u32 %v1476, 7
    %v1478 = vsub.s32 0, %v1477
    %v1479 = vrot.slane %v1474, %v1478
    %v1482 = vsel %vm217, %v1463, 0
    %1484 = vmatprep.subr.mxu0 0.0
    %1485 = vmatpush1.msra.mxu0 %v1465
    %1486 = vmatprep.subr.mxu0 0.0
    %1487 = vmatpush1.msra.mxu0 %v1466
    %1488 = vmatprep.subr.mxu0 0.0
    %1489 = vmatpush1.msra.mxu0 %v1467
    %1490 = vmatprep.subr.mxu0 0.0
    %1491 = vmatpush1.msra.mxu0 %v1468
    %1492 = vmatprep.subr.mxu0 0.0
    %1493 = vmatpush1.msra.mxu0 %v1469
    %1494 = vmatprep.subr.mxu0 0.0
    %1495 = vmatpush1.msra.mxu0 %v1470
    %1496 = vmatprep.subr.mxu0 0.0
    %1497 = vmatpush1.msra.mxu0 %v1471
    %1498 = vmatprep.subr.mxu0 0.0
    %1499 = vmatpush1.msra.mxu0 %v1472
    %1500 = vmatprep.subr.mxu0 0.0
    %1501 = vmatpush1.msra.mxu0 0.0
    %1502 = vmatprep.subr.mxu0 0.0
    %1503 = vmatpush1.msra.mxu0 0.0
    %1504 = vmatprep.subr.mxu0 0.0
    %1505 = vmatpush1.msra.mxu0 0.0
    %1506 = vmatprep.subr.mxu0 0.0
    %1507 = vmatpush1.msra.mxu0 0.0
    %1508 = vmatprep.subr.mxu0 0.0
    %1509 = vmatpush1.msra.mxu0 0.0
    %1510 = vmatprep.subr.mxu0 0.0
    %1511 = vmatpush1.msra.mxu0 0.0
    %1512 = vmatprep.subr.mxu0 0.0
    %1513 = vmatpush1.msra.mxu0 0.0
    %1514 = vmatprep.subr.mxu0 0.0
    %1515 = vmatpush1.msra.mxu0 0.0
    %1516 = vmatprep.subr.mxu0 0.0
    %1517 = vmatpush1.msra.mxu0 0.0
    %1518 = vmatprep.subr.mxu0 0.0
    %1519 = vmatpush1.msra.mxu0 0.0
    %1520 = vmatprep.subr.mxu0 0.0
    %1521 = vmatpush1.msra.mxu0 0.0
    %1522 = vmatprep.subr.mxu0 0.0
    %1523 = vmatpush1.msra.mxu0 0.0
    %1524 = vmatprep.subr.mxu0 0.0
    %1525 = vmatpush1.msra.mxu0 0.0
    %1526 = vmatprep.subr.mxu0 0.0
    %1527 = vmatpush1.msra.mxu0 0.0
    %1528 = vmatprep.subr.mxu0 0.0
    %1529 = vmatpush1.msra.mxu0 0.0
    %1530 = vmatprep.subr.mxu0 0.0
    %1531 = vmatpush1.msra.mxu0 0.0
    %1532 = vmatprep.subr.mxu0 0.0
    %1533 = vmatpush1.msra.mxu0 0.0
    %1534 = vmatprep.subr.mxu0 0.0
    %1535 = vmatpush1.msra.mxu0 0.0
    %1536 = vmatprep.subr.mxu0 0.0
    %1537 = vmatpush1.msra.mxu0 0.0
    %1538 = vmatprep.subr.mxu0 0.0
    %1539 = vmatpush1.msra.mxu0 0.0
    %1540 = vmatprep.subr.mxu0 0.0
    %1541 = vmatpush1.msra.mxu0 0.0
    %1542 = vmatprep.subr.mxu0 0.0
    %1543 = vmatpush1.msra.mxu0 0.0
    %1544 = vmatprep.subr.mxu0 0.0
    %1545 = vmatpush1.msra.mxu0 0.0
    %1546 = vmatprep.subr.mxu0 0.0
    %1547 = vmatpush1.msra.mxu0 0.0
    %1548 = vmatprep.mubr.f32.mxu0 0.0
    %1549 = vmatmul.mubr.f32.gmra.mrb[0].mxu0 %v1482
    %v1550 = vpop.f32.mrb[0].mxu0
    %v1551 = vadd.f32 %v1479, %v1550
    %v1552 = vpop.f32.mrb[0].mxu0
    %1553 = vdwg.mxu0
    %v1554 = vtanh.pop %v1551
    %v1555 = vmul.f32 %v1554, 1.442695
    %v1556 = vpow.pop %v1555
    %v1557 = vmul.f32 %v1191, %v1556
    %1559 = vrot.lane.b32.xlu0 %v1551, 120
    %v1560 = vpop.permute.xlu0 %1559
    %v1562 = vadd.f32 %v1557, %v1560
    %v1563 = vsel %vm125, %v1554, 0.0
    %1564 = vadd.xlane.f32.xlu0 %v1563
    %v1565 = vpop.xlane.xlu0 %1564
    %v1566 = vadd.f32 %v862, %v1565
    %s1567 = scalar_lea.vmem %s5, 24
    %v1568 = vld [vmem:[%s1567] sm:$0xff]
    %s1569 = scalar_lea.vmem %s6, 3
    %v1570 = vld [vmem:[%s1569] sm:$0x1]
    %v1572 = vlaneseq
    %v1573 = vshrl.u32 %v1572, 7
    %v1574 = vsub.s32 0, %v1573
    %v1575 = vrot.slane %v1570, %v1574
    %v1578 = vsel %vm125, %v1562, 0
    %1580 = vmatprep.subr.mxu0 0.0
    %1581 = vmatpush1.msra.mxu0 %v1568
    %1582 = vmatprep.subr.mxu0 0.0
    %1583 = vmatpush1.msra.mxu0 0.0
    %1584 = vmatprep.subr.mxu0 0.0
    %1585 = vmatpush1.msra.mxu0 0.0
    %1586 = vmatprep.subr.mxu0 0.0
    %1587 = vmatpush1.msra.mxu0 0.0
    %1588 = vmatprep.subr.mxu0 0.0
    %1589 = vmatpush1.msra.mxu0 0.0
    %1590 = vmatprep.subr.mxu0 0.0
    %1591 = vmatpush1.msra.mxu0 0.0
    %1592 = vmatprep.subr.mxu0 0.0
    %1593 = vmatpush1.msra.mxu0 0.0
    %1594 = vmatprep.subr.mxu0 0.0
    %1595 = vmatpush1.msra.mxu0 0.0
    %1596 = vmatprep.subr.mxu0 0.0
    %1597 = vmatpush1.msra.mxu0 0.0
    %1598 = vmatprep.subr.mxu0 0.0
    %1599 = vmatpush1.msra.mxu0 0.0
    %1600 = vmatprep.subr.mxu0 0.0
    %1601 = vmatpush1.msra.mxu0 0.0
    %1602 = vmatprep.subr.mxu0 0.0
    %1603 = vmatpush1.msra.mxu0 0.0
    %1604 = vmatprep.subr.mxu0 0.0
    %1605 = vmatpush1.msra.mxu0 0.0
    %1606 = vmatprep.subr.mxu0 0.0
    %1607 = vmatpush1.msra.mxu0 0.0
    %1608 = vmatprep.subr.mxu0 0.0
    %1609 = vmatpush1.msra.mxu0 0.0
    %1610 = vmatprep.subr.mxu0 0.0
    %1611 = vmatpush1.msra.mxu0 0.0
    %1612 = vmatprep.subr.mxu0 0.0
    %1613 = vmatpush1.msra.mxu0 0.0
    %1614 = vmatprep.subr.mxu0 0.0
    %1615 = vmatpush1.msra.mxu0 0.0
    %1616 = vmatprep.subr.mxu0 0.0
    %1617 = vmatpush1.msra.mxu0 0.0
    %1618 = vmatprep.subr.mxu0 0.0
    %1619 = vmatpush1.msra.mxu0 0.0
    %1620 = vmatprep.subr.mxu0 0.0
    %1621 = vmatpush1.msra.mxu0 0.0
    %1622 = vmatprep.subr.mxu0 0.0
    %1623 = vmatpush1.msra.mxu0 0.0
    %1624 = vmatprep.subr.mxu0 0.0
    %1625 = vmatpush1.msra.mxu0 0.0
    %1626 = vmatprep.subr.mxu0 0.0
    %1627 = vmatpush1.msra.mxu0 0.0
    %1628 = vmatprep.subr.mxu0 0.0
    %1629 = vmatpush1.msra.mxu0 0.0
    %1630 = vmatprep.subr.mxu0 0.0
    %1631 = vmatpush1.msra.mxu0 0.0
    %1632 = vmatprep.subr.mxu0 0.0
    %1633 = vmatpush1.msra.mxu0 0.0
    %1634 = vmatprep.subr.mxu0 0.0
    %1635 = vmatpush1.msra.mxu0 0.0
    %1636 = vmatprep.subr.mxu0 0.0
    %1637 = vmatpush1.msra.mxu0 0.0
    %1638 = vmatprep.subr.mxu0 0.0
    %1639 = vmatpush1.msra.mxu0 0.0
    %1640 = vmatprep.subr.mxu0 0.0
    %1641 = vmatpush1.msra.mxu0 0.0
    %1642 = vmatprep.subr.mxu0 0.0
    %1643 = vmatpush1.msra.mxu0 0.0
    %1644 = vmatprep.mubr.f32.mxu0 0.0
    %1645 = vmatmul.mubr.f32.gmra.mrb[0].mxu0 %v1578
    %v1646 = vpop.f32.mrb[0].mxu0
    %v1647 = vadd.f32 %v1575, %v1646
    %v1648 = vpop.f32.mrb[0].mxu0
    %1649 = vdwg.mxu0
    %vm1650 = vcmp.ge.f32.partialorder %v1647, 0.0
    %v1651 = vmul.f32 %v1647, 0.01
    %v1652 = vsel %vm1650, %v1647, %v1651
    %s1653 = scalar_lea.vmem [#allocation3], 384
    %v1654 = vld [vmem:[%s1653] sm:$0xff]
    %v1655 = vld [vmem:[%s1653 + $0x8] sm:$0xff]
    %v1656 = vld [vmem:[%s1653 + $0x10] sm:$0xff]
    %v1657 = vld [vmem:[%s1653 + $0x18] sm:$0xff]
    %v1658 = vld [vmem:[%s1653 + $0x20] sm:$0xff]
    %v1659 = vld [vmem:[%s1653 + $0x28] sm:$0xff]
    %v1660 = vld [vmem:[%s1653 + $0x30] sm:$0xff]
    %v1661 = vld [vmem:[%s1653 + $0x38] sm:$0xff]
    %s1662 = scalar_lea.vmem %s8, 6
    %v1663 = vld [vmem:[%s1662] sm:$0x1]
    %v1665 = vlaneseq
    %v1666 = vshrl.u32 %v1665, 7
    %v1667 = vsub.s32 0, %v1666
    %v1668 = vrot.slane %v1663, %v1667
    %v1671 = vsel %vm217, %v1652, 0
    %1673 = vmatprep.subr.mxu0 0.0
    %1674 = vmatpush1.msra.mxu0 %v1654
    %1675 = vmatprep.subr.mxu0 0.0
    %1676 = vmatpush1.msra.mxu0 %v1655
    %1677 = vmatprep.subr.mxu0 0.0
    %1678 = vmatpush1.msra.mxu0 %v1656
    %1679 = vmatprep.subr.mxu0 0.0
    %1680 = vmatpush1.msra.mxu0 %v1657
    %1681 = vmatprep.subr.mxu0 0.0
    %1682 = vmatpush1.msra.mxu0 %v1658
    %1683 = vmatprep.subr.mxu0 0.0
    %1684 = vmatpush1.msra.mxu0 %v1659
    %1685 = vmatprep.subr.mxu0 0.0
    %1686 = vmatpush1.msra.mxu0 %v1660
    %1687 = vmatprep.subr.mxu0 0.0
    %1688 = vmatpush1.msra.mxu0 %v1661
    %1689 = vmatprep.subr.mxu0 0.0
    %1690 = vmatpush1.msra.mxu0 0.0
    %1691 = vmatprep.subr.mxu0 0.0
    %1692 = vmatpush1.msra.mxu0 0.0
    %1693 = vmatprep.subr.mxu0 0.0
    %1694 = vmatpush1.msra.mxu0 0.0
    %1695 = vmatprep.subr.mxu0 0.0
    %1696 = vmatpush1.msra.mxu0 0.0
    %1697 = vmatprep.subr.mxu0 0.0
    %1698 = vmatpush1.msra.mxu0 0.0
    %1699 = vmatprep.subr.mxu0 0.0
    %1700 = vmatpush1.msra.mxu0 0.0
    %1701 = vmatprep.subr.mxu0 0.0
    %1702 = vmatpush1.msra.mxu0 0.0
    %1703 = vmatprep.subr.mxu0 0.0
    %1704 = vmatpush1.msra.mxu0 0.0
    %1705 = vmatprep.subr.mxu0 0.0
    %1706 = vmatpush1.msra.mxu0 0.0
    %1707 = vmatprep.subr.mxu0 0.0
    %1708 = vmatpush1.msra.mxu0 0.0
    %1709 = vmatprep.subr.mxu0 0.0
    %1710 = vmatpush1.msra.mxu0 0.0
    %1711 = vmatprep.subr.mxu0 0.0
    %1712 = vmatpush1.msra.mxu0 0.0
    %1713 = vmatprep.subr.mxu0 0.0
    %1714 = vmatpush1.msra.mxu0 0.0
    %1715 = vmatprep.subr.mxu0 0.0
    %1716 = vmatpush1.msra.mxu0 0.0
    %1717 = vmatprep.subr.mxu0 0.0
    %1718 = vmatpush1.msra.mxu0 0.0
    %1719 = vmatprep.subr.mxu0 0.0
    %1720 = vmatpush1.msra.mxu0 0.0
    %1721 = vmatprep.subr.mxu0 0.0
    %1722 = vmatpush1.msra.mxu0 0.0
    %1723 = vmatprep.subr.mxu0 0.0
    %1724 = vmatpush1.msra.mxu0 0.0
    %1725 = vmatprep.subr.mxu0 0.0
    %1726 = vmatpush1.msra.mxu0 0.0
    %1727 = vmatprep.subr.mxu0 0.0
    %1728 = vmatpush1.msra.mxu0 0.0
    %1729 = vmatprep.subr.mxu0 0.0
    %1730 = vmatpush1.msra.mxu0 0.0
    %1731 = vmatprep.subr.mxu0 0.0
    %1732 = vmatpush1.msra.mxu0 0.0
    %1733 = vmatprep.subr.mxu0 0.0
    %1734 = vmatpush1.msra.mxu0 0.0
    %1735 = vmatprep.subr.mxu0 0.0
    %1736 = vmatpush1.msra.mxu0 0.0
    %1737 = vmatprep.mubr.f32.mxu0 0.0
    %1738 = vmatmul.mubr.f32.gmra.mrb[0].mxu0 %v1671
    %v1739 = vpop.f32.mrb[0].mxu0
    %v1740 = vadd.f32 %v1668, %v1739
    %v1741 = vpop.f32.mrb[0].mxu0
    %1742 = vdwg.mxu0
    %vm1743 = vcmp.ge.f32.partialorder %v1740, 0.0
    %v1744 = vmul.f32 %v1740, 0.01
    %v1745 = vsel %vm1743, %v1740, %v1744
    %s1746 = scalar_lea.vmem [#allocation3], 448
    %v1747 = vld [vmem:[%s1746] sm:$0xff]
    %v1748 = vld [vmem:[%s1746 + $0x8] sm:$0xff]
    %v1749 = vld [vmem:[%s1746 + $0x10] sm:$0xff]
    %v1750 = vld [vmem:[%s1746 + $0x18] sm:$0xff]
    %v1751 = vld [vmem:[%s1746 + $0x20] sm:$0xff]
    %v1752 = vld [vmem:[%s1746 + $0x28] sm:$0xff]
    %v1753 = vld [vmem:[%s1746 + $0x30] sm:$0xff]
    %v1754 = vld [vmem:[%s1746 + $0x38] sm:$0xff]
    %s1755 = scalar_lea.vmem %s8, 7
    %v1756 = vld [vmem:[%s1755] sm:$0x1]
    %v1758 = vlaneseq
    %v1759 = vshrl.u32 %v1758, 7
    %v1760 = vsub.s32 0, %v1759
    %v1761 = vrot.slane %v1756, %v1760
    %v1764 = vsel %vm217, %v1745, 0
    %1766 = vmatprep.subr.mxu0 0.0
    %1767 = vmatpush1.msra.mxu0 %v1747
    %1768 = vmatprep.subr.mxu0 0.0
    %1769 = vmatpush1.msra.mxu0 %v1748
    %1770 = vmatprep.subr.mxu0 0.0
    %1771 = vmatpush1.msra.mxu0 %v1749
    %1772 = vmatprep.subr.mxu0 0.0
    %1773 = vmatpush1.msra.mxu0 %v1750
    %1774 = vmatprep.subr.mxu0 0.0
    %1775 = vmatpush1.msra.mxu0 %v1751
    %1776 = vmatprep.subr.mxu0 0.0
    %1777 = vmatpush1.msra.mxu0 %v1752
    %1778 = vmatprep.subr.mxu0 0.0
    %1779 = vmatpush1.msra.mxu0 %v1753
    %1780 = vmatprep.subr.mxu0 0.0
    %1781 = vmatpush1.msra.mxu0 %v1754
    %1782 = vmatprep.subr.mxu0 0.0
    %1783 = vmatpush1.msra.mxu0 0.0
    %1784 = vmatprep.subr.mxu0 0.0
    %1785 = vmatpush1.msra.mxu0 0.0
    %1786 = vmatprep.subr.mxu0 0.0
    %1787 = vmatpush1.msra.mxu0 0.0
    %1788 = vmatprep.subr.mxu0 0.0
    %1789 = vmatpush1.msra.mxu0 0.0
    %1790 = vmatprep.subr.mxu0 0.0
    %1791 = vmatpush1.msra.mxu0 0.0
    %1792 = vmatprep.subr.mxu0 0.0
    %1793 = vmatpush1.msra.mxu0 0.0
    %1794 = vmatprep.subr.mxu0 0.0
    %1795 = vmatpush1.msra.mxu0 0.0
    %1796 = vmatprep.subr.mxu0 0.0
    %1797 = vmatpush1.msra.mxu0 0.0
    %1798 = vmatprep.subr.mxu0 0.0
    %1799 = vmatpush1.msra.mxu0 0.0
    %1800 = vmatprep.subr.mxu0 0.0
    %1801 = vmatpush1.msra.mxu0 0.0
    %1802 = vmatprep.subr.mxu0 0.0
    %1803 = vmatpush1.msra.mxu0 0.0
    %1804 = vmatprep.subr.mxu0 0.0
    %1805 = vmatpush1.msra.mxu0 0.0
    %1806 = vmatprep.subr.mxu0 0.0
    %1807 = vmatpush1.msra.mxu0 0.0
    %1808 = vmatprep.subr.mxu0 0.0
    %1809 = vmatpush1.msra.mxu0 0.0
    %1810 = vmatprep.subr.mxu0 0.0
    %1811 = vmatpush1.msra.mxu0 0.0
    %1812 = vmatprep.subr.mxu0 0.0
    %1813 = vmatpush1.msra.mxu0 0.0
    %1814 = vmatprep.subr.mxu0 0.0
    %1815 = vmatpush1.msra.mxu0 0.0
    %1816 = vmatprep.subr.mxu0 0.0
    %1817 = vmatpush1.msra.mxu0 0.0
    %1818 = vmatprep.subr.mxu0 0.0
    %1819 = vmatpush1.msra.mxu0 0.0
    %1820 = vmatprep.subr.mxu0 0.0
    %1821 = vmatpush1.msra.mxu0 0.0
    %1822 = vmatprep.subr.mxu0 0.0
    %1823 = vmatpush1.msra.mxu0 0.0
    %1824 = vmatprep.subr.mxu0 0.0
    %1825 = vmatpush1.msra.mxu0 0.0
    %1826 = vmatprep.subr.mxu0 0.0
    %1827 = vmatpush1.msra.mxu0 0.0
    %1828 = vmatprep.subr.mxu0 0.0
    %1829 = vmatpush1.msra.mxu0 0.0
    %1830 = vmatprep.mubr.f32.mxu0 0.0
    %1831 = vmatmul.mubr.f32.gmra.mrb[0].mxu0 %v1764
    %v1832 = vpop.f32.mrb[0].mxu0
    %v1833 = vadd.f32 %v1761, %v1832
    %v1834 = vpop.f32.mrb[0].mxu0
    %1835 = vdwg.mxu0
    %vm1836 = vcmp.ge.f32.partialorder %v1833, 0.0
    %v1837 = vmul.f32 %v1833, 0.01
    %v1838 = vsel %vm1836, %v1833, %v1837
    %s1839 = scalar_lea.vmem %s9, 192
    %v1840 = vld [vmem:[%s1839] sm:$0xff]
    %v1841 = vld [vmem:[%s1839 + $0x8] sm:$0xff]
    %v1842 = vld [vmem:[%s1839 + $0x10] sm:$0xff]
    %v1843 = vld [vmem:[%s1839 + $0x18] sm:$0xff]
    %v1844 = vld [vmem:[%s1839 + $0x20] sm:$0xff]
    %v1845 = vld [vmem:[%s1839 + $0x28] sm:$0xff]
    %v1846 = vld [vmem:[%s1839 + $0x30] sm:$0xff]
    %v1847 = vld [vmem:[%s1839 + $0x38] sm:$0xff]
    %s1848 = scalar_lea.vmem %s10, 3
    %v1849 = vld [vmem:[%s1848] sm:$0x1]
    %v1851 = vlaneseq
    %v1852 = vshrl.u32 %v1851, 7
    %v1853 = vsub.s32 0, %v1852
    %v1854 = vrot.slane %v1849, %v1853
    %v1857 = vsel %vm217, %v1838, 0
    %1859 = vmatprep.subr.mxu0 0.0
    %1860 = vmatpush1.msra.mxu0 %v1840
    %1861 = vmatprep.subr.mxu0 0.0
    %1862 = vmatpush1.msra.mxu0 %v1841
    %1863 = vmatprep.subr.mxu0 0.0
    %1864 = vmatpush1.msra.mxu0 %v1842
    %1865 = vmatprep.subr.mxu0 0.0
    %1866 = vmatpush1.msra.mxu0 %v1843
    %1867 = vmatprep.subr.mxu0 0.0
    %1868 = vmatpush1.msra.mxu0 %v1844
    %1869 = vmatprep.subr.mxu0 0.0
    %1870 = vmatpush1.msra.mxu0 %v1845
    %1871 = vmatprep.subr.mxu0 0.0
    %1872 = vmatpush1.msra.mxu0 %v1846
    %1873 = vmatprep.subr.mxu0 0.0
    %1874 = vmatpush1.msra.mxu0 %v1847
    %1875 = vmatprep.subr.mxu0 0.0
    %1876 = vmatpush1.msra.mxu0 0.0
    %1877 = vmatprep.subr.mxu0 0.0
    %1878 = vmatpush1.msra.mxu0 0.0
    %1879 = vmatprep.subr.mxu0 0.0
    %1880 = vmatpush1.msra.mxu0 0.0
    %1881 = vmatprep.subr.mxu0 0.0
    %1882 = vmatpush1.msra.mxu0 0.0
    %1883 = vmatprep.subr.mxu0 0.0
    %1884 = vmatpush1.msra.mxu0 0.0
    %1885 = vmatprep.subr.mxu0 0.0
    %1886 = vmatpush1.msra.mxu0 0.0
    %1887 = vmatprep.subr.mxu0 0.0
    %1888 = vmatpush1.msra.mxu0 0.0
    %1889 = vmatprep.subr.mxu0 0.0
    %1890 = vmatpush1.msra.mxu0 0.0
    %1891 = vmatprep.subr.mxu0 0.0
    %1892 = vmatpush1.msra.mxu0 0.0
    %1893 = vmatprep.subr.mxu0 0.0
    %1894 = vmatpush1.msra.mxu0 0.0
    %1895 = vmatprep.subr.mxu0 0.0
    %1896 = vmatpush1.msra.mxu0 0.0
    %1897 = vmatprep.subr.mxu0 0.0
    %1898 = vmatpush1.msra.mxu0 0.0
    %1899 = vmatprep.subr.mxu0 0.0
    %1900 = vmatpush1.msra.mxu0 0.0
    %1901 = vmatprep.subr.mxu0 0.0
    %1902 = vmatpush1.msra.mxu0 0.0
    %1903 = vmatprep.subr.mxu0 0.0
    %1904 = vmatpush1.msra.mxu0 0.0
    %1905 = vmatprep.subr.mxu0 0.0
    %1906 = vmatpush1.msra.mxu0 0.0
    %1907 = vmatprep.subr.mxu0 0.0
    %1908 = vmatpush1.msra.mxu0 0.0
    %1909 = vmatprep.subr.mxu0 0.0
    %1910 = vmatpush1.msra.mxu0 0.0
    %1911 = vmatprep.subr.mxu0 0.0
    %1912 = vmatpush1.msra.mxu0 0.0
    %1913 = vmatprep.subr.mxu0 0.0
    %1914 = vmatpush1.msra.mxu0 0.0
    %1915 = vmatprep.subr.mxu0 0.0
    %1916 = vmatpush1.msra.mxu0 0.0
    %1917 = vmatprep.subr.mxu0 0.0
    %1918 = vmatpush1.msra.mxu0 0.0
    %1919 = vmatprep.subr.mxu0 0.0
    %1920 = vmatpush1.msra.mxu0 0.0
    %1921 = vmatprep.subr.mxu0 0.0
    %1922 = vmatpush1.msra.mxu0 0.0
    %1923 = vmatprep.mubr.f32.mxu0 0.0
    %1924 = vmatmul.mubr.f32.gmra.mrb[0].mxu0 %v1857
    %v1925 = vpop.f32.mrb[0].mxu0
    %v1926 = vadd.f32 %v1854, %v1925
    %v1927 = vpop.f32.mrb[0].mxu0
    %1928 = vdwg.mxu0
    %v1929 = vtanh.pop %v1926
    %v1930 = vmul.f32 %v1929, 1.442695
    %v1931 = vpow.pop %v1930
    %v1932 = vmul.f32 %v1188, %v1931
    %1934 = vrot.lane.b32.xlu0 %v1926, 120
    %v1935 = vpop.permute.xlu0 %1934
    %v1937 = vadd.f32 %v1932, %v1935
    %v1938 = vsel %vm125, %v1929, 0.0
    %1939 = vadd.xlane.f32.xlu0 %v1938
    %v1940 = vpop.xlane.xlu0 %1939
    %v1941 = vadd.f32 %v1566, %v1940
    %s1942 = scalar_lea.vmem %s11, 8
    %v1943 = vld [vmem:[%s1942] sm:$0xff]
    %s1944 = scalar_lea.vmem %s13, 8
    %v1945 = vld [vmem:[%s1944] sm:$0xff]
    %v1947 = vsel %vm125, %v1937, 0
    %1949 = vmatprep.subr.mxu0 0.0
    %1950 = vmatpush1.msra.mxu0 %v1945
    %1951 = vmatprep.subr.mxu0 0.0
    %1952 = vmatpush1.msra.mxu0 0.0
    %1953 = vmatprep.subr.mxu0 0.0
    %1954 = vmatpush1.msra.mxu0 0.0
    %1955 = vmatprep.subr.mxu0 0.0
    %1956 = vmatpush1.msra.mxu0 0.0
    %1957 = vmatprep.subr.mxu0 0.0
    %1958 = vmatpush1.msra.mxu0 0.0
    %1959 = vmatprep.subr.mxu0 0.0
    %1960 = vmatpush1.msra.mxu0 0.0
    %1961 = vmatprep.subr.mxu0 0.0
    %1962 = vmatpush1.msra.mxu0 0.0
    %1963 = vmatprep.subr.mxu0 0.0
    %1964 = vmatpush1.msra.mxu0 0.0
    %1965 = vmatprep.subr.mxu0 0.0
    %1966 = vmatpush1.msra.mxu0 0.0
    %1967 = vmatprep.subr.mxu0 0.0
    %1968 = vmatpush1.msra.mxu0 0.0
    %1969 = vmatprep.subr.mxu0 0.0
    %1970 = vmatpush1.msra.mxu0 0.0
    %1971 = vmatprep.subr.mxu0 0.0
    %1972 = vmatpush1.msra.mxu0 0.0
    %1973 = vmatprep.subr.mxu0 0.0
    %1974 = vmatpush1.msra.mxu0 0.0
    %1975 = vmatprep.subr.mxu0 0.0
    %1976 = vmatpush1.msra.mxu0 0.0
    %1977 = vmatprep.subr.mxu0 0.0
    %1978 = vmatpush1.msra.mxu0 0.0
    %1979 = vmatprep.subr.mxu0 0.0
    %1980 = vmatpush1.msra.mxu0 0.0
    %1981 = vmatprep.subr.mxu0 0.0
    %1982 = vmatpush1.msra.mxu0 0.0
    %1983 = vmatprep.subr.mxu0 0.0
    %1984 = vmatpush1.msra.mxu0 0.0
    %1985 = vmatprep.subr.mxu0 0.0
    %1986 = vmatpush1.msra.mxu0 0.0
    %1987 = vmatprep.subr.mxu0 0.0
    %1988 = vmatpush1.msra.mxu0 0.0
    %1989 = vmatprep.subr.mxu0 0.0
    %1990 = vmatpush1.msra.mxu0 0.0
    %1991 = vmatprep.subr.mxu0 0.0
    %1992 = vmatpush1.msra.mxu0 0.0
    %1993 = vmatprep.subr.mxu0 0.0
    %1994 = vmatpush1.msra.mxu0 0.0
    %1995 = vmatprep.subr.mxu0 0.0
    %1996 = vmatpush1.msra.mxu0 0.0
    %1997 = vmatprep.subr.mxu0 0.0
    %1998 = vmatpush1.msra.mxu0 0.0
    %1999 = vmatprep.subr.mxu0 0.0
    %2000 = vmatpush1.msra.mxu0 0.0
    %2001 = vmatprep.subr.mxu0 0.0
    %2002 = vmatpush1.msra.mxu0 0.0
    %2003 = vmatprep.subr.mxu0 0.0
    %2004 = vmatpush1.msra.mxu0 0.0
    %2005 = vmatprep.subr.mxu0 0.0
    %2006 = vmatpush1.msra.mxu0 0.0
    %2007 = vmatprep.subr.mxu0 0.0
    %2008 = vmatpush1.msra.mxu0 0.0
    %2009 = vmatprep.subr.mxu0 0.0
    %2010 = vmatpush1.msra.mxu0 0.0
    %2011 = vmatprep.subr.mxu0 0.0
    %2012 = vmatpush1.msra.mxu0 0.0
    %2013 = vmatprep.mubr.f32.mxu0 0.0
    %2014 = vmatmul.mubr.f32.gmra.mrb[0].mxu0 %v1947
    %v2015 = vpop.f32.mrb[0].mxu0
    %v2016 = vadd.f32 0.0, %v2015
    %v2017 = vpop.f32.mrb[0].mxu0
    %2018 = vdwg.mxu0
    %2019 = vmatprep.subr.mxu0 0.0
    %2020 = vmatpush1.msra.mxu0 %v1943
    %2021 = vmatprep.subr.mxu0 0.0
    %2022 = vmatpush1.msra.mxu0 0.0
    %2023 = vmatprep.subr.mxu0 0.0
    %2024 = vmatpush1.msra.mxu0 0.0
    %2025 = vmatprep.subr.mxu0 0.0
    %2026 = vmatpush1.msra.mxu0 0.0
    %2027 = vmatprep.subr.mxu0 0.0
    %2028 = vmatpush1.msra.mxu0 0.0
    %2029 = vmatprep.subr.mxu0 0.0
    %2030 = vmatpush1.msra.mxu0 0.0
    %2031 = vmatprep.subr.mxu0 0.0
    %2032 = vmatpush1.msra.mxu0 0.0
    %2033 = vmatprep.subr.mxu0 0.0
    %2034 = vmatpush1.msra.mxu0 0.0
    %2035 = vmatprep.subr.mxu0 0.0
    %2036 = vmatpush1.msra.mxu0 0.0
    %2037 = vmatprep.subr.mxu0 0.0
    %2038 = vmatpush1.msra.mxu0 0.0
    %2039 = vmatprep.subr.mxu0 0.0
    %2040 = vmatpush1.msra.mxu0 0.0
    %2041 = vmatprep.subr.mxu0 0.0
    %2042 = vmatpush1.msra.mxu0 0.0
    %2043 = vmatprep.subr.mxu0 0.0
    %2044 = vmatpush1.msra.mxu0 0.0
    %2045 = vmatprep.subr.mxu0 0.0
    %2046 = vmatpush1.msra.mxu0 0.0
    %2047 = vmatprep.subr.mxu0 0.0
    %2048 = vmatpush1.msra.mxu0 0.0
    %2049 = vmatprep.subr.mxu0 0.0
    %2050 = vmatpush1.msra.mxu0 0.0
    %2051 = vmatprep.subr.mxu0 0.0
    %2052 = vmatpush1.msra.mxu0 0.0
    %2053 = vmatprep.subr.mxu0 0.0
    %2054 = vmatpush1.msra.mxu0 0.0
    %2055 = vmatprep.subr.mxu0 0.0
    %2056 = vmatpush1.msra.mxu0 0.0
    %2057 = vmatprep.subr.mxu0 0.0
    %2058 = vmatpush1.msra.mxu0 0.0
    %2059 = vmatprep.subr.mxu0 0.0
    %2060 = vmatpush1.msra.mxu0 0.0
    %2061 = vmatprep.subr.mxu0 0.0
    %2062 = vmatpush1.msra.mxu0 0.0
    %2063 = vmatprep.subr.mxu0 0.0
    %2064 = vmatpush1.msra.mxu0 0.0
    %2065 = vmatprep.subr.mxu0 0.0
    %2066 = vmatpush1.msra.mxu0 0.0
    %2067 = vmatprep.subr.mxu0 0.0
    %2068 = vmatpush1.msra.mxu0 0.0
    %2069 = vmatprep.subr.mxu0 0.0
    %2070 = vmatpush1.msra.mxu0 0.0
    %2071 = vmatprep.subr.mxu0 0.0
    %2072 = vmatpush1.msra.mxu0 0.0
    %2073 = vmatprep.subr.mxu0 0.0
    %2074 = vmatpush1.msra.mxu0 0.0
    %2075 = vmatprep.subr.mxu0 0.0
    %2076 = vmatpush1.msra.mxu0 0.0
    %2077 = vmatprep.subr.mxu0 0.0
    %2078 = vmatpush1.msra.mxu0 0.0
    %2079 = vmatprep.subr.mxu0 0.0
    %2080 = vmatpush1.msra.mxu0 0.0
    %2081 = vmatprep.subr.mxu0 0.0
    %2082 = vmatpush1.msra.mxu0 0.0
    %2083 = vmatprep.mubr.f32.mxu0 0.0
    %2084 = vmatmul.mubr.f32.gmra.mrb[0].mxu0 %v1578
    %v2085 = vpop.f32.mrb[0].mxu0
    %v2086 = vadd.f32 %v2016, %v2085
    %v2087 = vpop.f32.mrb[0].mxu0
    %2088 = vdwg.mxu0
    %s2089 = scalar_lea.vmem %s12, 8
    %v2090 = vld [vmem:[%s2089] sm:$0xff]
    %s2091 = scalar_lea.vmem %s14, 8
    %v2092 = vld [vmem:[%s2091] sm:$0xff]
    %2093 = vmatprep.subr.mxu0 0.0
    %2094 = vmatpush1.msra.mxu0 %v2092
    %2095 = vmatprep.subr.mxu0 0.0
    %2096 = vmatpush1.msra.mxu0 0.0
    %2097 = vmatprep.subr.mxu0 0.0
    %2098 = vmatpush1.msra.mxu0 0.0
    %2099 = vmatprep.subr.mxu0 0.0
    %2100 = vmatpush1.msra.mxu0 0.0
    %2101 = vmatprep.subr.mxu0 0.0
    %2102 = vmatpush1.msra.mxu0 0.0
    %2103 = vmatprep.subr.mxu0 0.0
    %2104 = vmatpush1.msra.mxu0 0.0
    %2105 = vmatprep.subr.mxu0 0.0
    %2106 = vmatpush1.msra.mxu0 0.0
    %2107 = vmatprep.subr.mxu0 0.0
    %2108 = vmatpush1.msra.mxu0 0.0
    %2109 = vmatprep.subr.mxu0 0.0
    %2110 = vmatpush1.msra.mxu0 0.0
    %2111 = vmatprep.subr.mxu0 0.0
    %2112 = vmatpush1.msra.mxu0 0.0
    %2113 = vmatprep.subr.mxu0 0.0
    %2114 = vmatpush1.msra.mxu0 0.0
    %2115 = vmatprep.subr.mxu0 0.0
    %2116 = vmatpush1.msra.mxu0 0.0
    %2117 = vmatprep.subr.mxu0 0.0
    %2118 = vmatpush1.msra.mxu0 0.0
    %2119 = vmatprep.subr.mxu0 0.0
    %2120 = vmatpush1.msra.mxu0 0.0
    %2121 = vmatprep.subr.mxu0 0.0
    %2122 = vmatpush1.msra.mxu0 0.0
    %2123 = vmatprep.subr.mxu0 0.0
    %2124 = vmatpush1.msra.mxu0 0.0
    %2125 = vmatprep.subr.mxu0 0.0
    %2126 = vmatpush1.msra.mxu0 0.0
    %2127 = vmatprep.subr.mxu0 0.0
    %2128 = vmatpush1.msra.mxu0 0.0
    %2129 = vmatprep.subr.mxu0 0.0
    %2130 = vmatpush1.msra.mxu0 0.0
    %2131 = vmatprep.subr.mxu0 0.0
    %2132 = vmatpush1.msra.mxu0 0.0
    %2133 = vmatprep.subr.mxu0 0.0
    %2134 = vmatpush1.msra.mxu0 0.0
    %2135 = vmatprep.subr.mxu0 0.0
    %2136 = vmatpush1.msra.mxu0 0.0
    %2137 = vmatprep.subr.mxu0 0.0
    %2138 = vmatpush1.msra.mxu0 0.0
    %2139 = vmatprep.subr.mxu0 0.0
    %2140 = vmatpush1.msra.mxu0 0.0
    %2141 = vmatprep.subr.mxu0 0.0
    %2142 = vmatpush1.msra.mxu0 0.0
    %2143 = vmatprep.subr.mxu0 0.0
    %2144 = vmatpush1.msra.mxu0 0.0
    %2145 = vmatprep.subr.mxu0 0.0
    %2146 = vmatpush1.msra.mxu0 0.0
    %2147 = vmatprep.subr.mxu0 0.0
    %2148 = vmatpush1.msra.mxu0 0.0
    %2149 = vmatprep.subr.mxu0 0.0
    %2150 = vmatpush1.msra.mxu0 0.0
    %2151 = vmatprep.subr.mxu0 0.0
    %2152 = vmatpush1.msra.mxu0 0.0
    %2153 = vmatprep.subr.mxu0 0.0
    %2154 = vmatpush1.msra.mxu0 0.0
    %2155 = vmatprep.subr.mxu0 0.0
    %2156 = vmatpush1.msra.mxu0 0.0
    %2157 = vmatprep.mubr.f32.mxu0 0.0
    %2158 = vmatmul.mubr.f32.gmra.mrb[0].mxu0 %v1947
    %v2159 = vpop.f32.mrb[0].mxu0
    %v2160 = vadd.f32 0.0, %v2159
    %v2161 = vpop.f32.mrb[0].mxu0
    %2162 = vdwg.mxu0
    %2163 = vmatprep.subr.mxu0 0.0
    %2164 = vmatpush1.msra.mxu0 %v2090
    %2165 = vmatprep.subr.mxu0 0.0
    %2166 = vmatpush1.msra.mxu0 0.0
    %2167 = vmatprep.subr.mxu0 0.0
    %2168 = vmatpush1.msra.mxu0 0.0
    %2169 = vmatprep.subr.mxu0 0.0
    %2170 = vmatpush1.msra.mxu0 0.0
    %2171 = vmatprep.subr.mxu0 0.0
    %2172 = vmatpush1.msra.mxu0 0.0
    %2173 = vmatprep.subr.mxu0 0.0
    %2174 = vmatpush1.msra.mxu0 0.0
    %2175 = vmatprep.subr.mxu0 0.0
    %2176 = vmatpush1.msra.mxu0 0.0
    %2177 = vmatprep.subr.mxu0 0.0
    %2178 = vmatpush1.msra.mxu0 0.0
    %2179 = vmatprep.subr.mxu0 0.0
    %2180 = vmatpush1.msra.mxu0 0.0
    %2181 = vmatprep.subr.mxu0 0.0
    %2182 = vmatpush1.msra.mxu0 0.0
    %2183 = vmatprep.subr.mxu0 0.0
    %2184 = vmatpush1.msra.mxu0 0.0
    %2185 = vmatprep.subr.mxu0 0.0
    %2186 = vmatpush1.msra.mxu0 0.0
    %2187 = vmatprep.subr.mxu0 0.0
    %2188 = vmatpush1.msra.mxu0 0.0
    %2189 = vmatprep.subr.mxu0 0.0
    %2190 = vmatpush1.msra.mxu0 0.0
    %2191 = vmatprep.subr.mxu0 0.0
    %2192 = vmatpush1.msra.mxu0 0.0
    %2193 = vmatprep.subr.mxu0 0.0
    %2194 = vmatpush1.msra.mxu0 0.0
    %2195 = vmatprep.subr.mxu0 0.0
    %2196 = vmatpush1.msra.mxu0 0.0
    %2197 = vmatprep.subr.mxu0 0.0
    %2198 = vmatpush1.msra.mxu0 0.0
    %2199 = vmatprep.subr.mxu0 0.0
    %2200 = vmatpush1.msra.mxu0 0.0
    %2201 = vmatprep.subr.mxu0 0.0
    %2202 = vmatpush1.msra.mxu0 0.0
    %2203 = vmatprep.subr.mxu0 0.0
    %2204 = vmatpush1.msra.mxu0 0.0
    %2205 = vmatprep.subr.mxu0 0.0
    %2206 = vmatpush1.msra.mxu0 0.0
    %2207 = vmatprep.subr.mxu0 0.0
    %2208 = vmatpush1.msra.mxu0 0.0
    %2209 = vmatprep.subr.mxu0 0.0
    %2210 = vmatpush1.msra.mxu0 0.0
    %2211 = vmatprep.subr.mxu0 0.0
    %2212 = vmatpush1.msra.mxu0 0.0
    %2213 = vmatprep.subr.mxu0 0.0
    %2214 = vmatpush1.msra.mxu0 0.0
    %2215 = vmatprep.subr.mxu0 0.0
    %2216 = vmatpush1.msra.mxu0 0.0
    %2217 = vmatprep.subr.mxu0 0.0
    %2218 = vmatpush1.msra.mxu0 0.0
    %2219 = vmatprep.subr.mxu0 0.0
    %2220 = vmatpush1.msra.mxu0 0.0
    %2221 = vmatprep.subr.mxu0 0.0
    %2222 = vmatpush1.msra.mxu0 0.0
    %2223 = vmatprep.subr.mxu0 0.0
    %2224 = vmatpush1.msra.mxu0 0.0
    %2225 = vmatprep.subr.mxu0 0.0
    %2226 = vmatpush1.msra.mxu0 0.0
    %2227 = vmatprep.mubr.f32.mxu0 0.0
    %2228 = vmatmul.mubr.f32.gmra.mrb[0].mxu0 %v1578
    %v2229 = vpop.f32.mrb[0].mxu0
    %v2230 = vadd.f32 %v2160, %v2229
    %v2231 = vpop.f32.mrb[0].mxu0
    %2232 = vdwg.mxu0
    %v2233 = vld [vmem:[#allocation2] sm:$0x1]
    %v2235 = vlaneseq
    %v2236 = vshrl.u32 %v2235, 7
    %v2237 = vsub.s32 0, %v2236
    %v2238 = vrot.slane %v2233, %v2237
    %v2240 = vadd.f32 %v1941, %v2238
    %2242 = vrot.lane.b32.xlu0 %v2230, 8
    %v2243 = vpop.permute.xlu0 %2242
    %v2245 = vsel %vm125, %v2086, %v2243
    %vm2246 = vcmask 130048
    %2247 = vst.msk [vmem:[#allocation6] sm:$0xff] %vm2246, %v2245
    %vm2248 = vcmask 7168
    %2249 = vst.msk [vmem:[%s17] sm:$0xff] %vm2248, %v2240
    // Predicated region
    $region70: #{tpu_custom_call.1} parent=1 // pred_check
      _
    $region71: #{tpu_custom_call.1} parent=1 // pred_check_branch
      %2251 = sbr.rel (0) target = $region73
    $region72: #{tpu_custom_call.1} parent=1 // pred_region
      %s2253 = ssub.s32 128, 128
      %2254 = vsyncadd [#allocation5], %s2253
      %s2256 = sshll.u32 [#allocation6], 4
      %s2257 = int_to_ptr.vmem [resolvable:$true] %s2256
      %2259 = dma.vmem_to_hbm [thread:$0]  %s2257, 128, %s16, [#allocation5]
    $region73: #{tpu_custom_call.1} parent=1 // pred_fallthru
      _
    // Predicated region
    $region74: #{tpu_custom_call.1} parent=1 // pred_check
      _
    $region75: #{tpu_custom_call.1} parent=1 // pred_check_branch
      %2261 = sbr.rel (0) target = $region77
    $region76: #{tpu_custom_call.1} parent=1 // pred_region
      _
    $region77: #{tpu_custom_call.1} parent=1 // pred_fallthru
      _
    // Predicated region
    $region78: #{tpu_custom_call.1} parent=1 // pred_check
      _
    $region79: #{tpu_custom_call.1} parent=1 // pred_check_branch
      %2263 = sbr.rel (0) target = $region81
    $region80: #{tpu_custom_call.1} parent=1 // pred_region
      %2264 = dma.done [#allocation5], 128
    $region81: #{tpu_custom_call.1} parent=1 // pred_fallthru
      _
    // Predicated region
    $region82: #{tpu_custom_call.1} parent=1 // pred_check
      _
    $region83: #{tpu_custom_call.1} parent=1 // pred_check_branch
      %2266 = sbr.rel (0) target = $region85
    $region84: #{tpu_custom_call.1} parent=1 // pred_region
      _
    $region85: #{tpu_custom_call.1} parent=1 // pred_fallthru
      _
    %2267 = vsyncpa [#allocation4], 1
    %2268 = vsyncpa [#allocation5], 1

</llo_original>
